<compile_context>
chip_gen: v5e
topology: v5e:2x2
jax: 0.10.0
libtpu: 0.0.40
codegen_flags: <defaults>
</compile_context>

<pallas_src>
import functools

import numpy as np
import jax
import jax.numpy as jnp
from jax.experimental import pallas as pl
from jax.experimental.pallas import tpu as pltpu


# ---------------------------------------------------------------------------
# Small in-kernel helpers
# ---------------------------------------------------------------------------
def _layernorm(x, gamma, beta, eps=1e-5):
    mu = jnp.mean(x, axis=-1, keepdims=True)
    var = jnp.mean((x - mu) ** 2, axis=-1, keepdims=True)
    return (x - mu) * jax.lax.rsqrt(var + eps) * gamma + beta


def _nt_dot(a, b):
    """(M, K) x (N, K)^T -> (M, N), f32 accumulation on the MXU."""
    return jax.lax.dot_general(a, b, (((1,), (1,)), ((), ())),
                               preferred_element_type=jnp.float32)


# ---------------------------------------------------------------------------
# Pallas kernel: relative attention (+ optional fused FFN)
# ---------------------------------------------------------------------------
def _rel_attn_kernel(*refs, h, causal, fuse_ffn, precise):
    if fuse_ffn:
        (xq_ref, k_ref, v_ref, ci_ref, si_ref, sj_ref, cj_ref,
         wq_ref, wre_ref, wro_ref, cb_ref, pb_ref,
         wo_ref, wob_ref, g_ref, bln_ref,
         w1_ref, bf1_ref, w2_ref, bf2_ref, g2_ref, bln2_ref,
         out_ref, o_scr) = refs
    else:
        (xq_ref, k_ref, v_ref, ci_ref, si_ref, sj_ref, cj_ref,
         wq_ref, wre_ref, wro_ref, cb_ref, pb_ref,
         wo_ref, wob_ref, g_ref, bln_ref,
         out_ref, o_scr) = refs

    f32 = jnp.float32
    cdt = wq_ref.dtype                     # MXU operand dtype (bf16 or f32)

    Xq = xq_ref[...]                       # (TQ, d) f32 query rows + residual
    TQ, d = Xq.shape
    kb = k_ref[...]                        # (L2, d) cdt  K = Y @ We (precomputed)
    vb = v_ref[...]                        # (L2, d) cdt  V = Y @ Wv (precomputed)
    L2 = kb.shape[0]
    H = d // h

    # ---- full-width Q projection: one K=d MXU matmul ------------------------
    q = jnp.dot(Xq.astype(cdt), wq_ref[...], preferred_element_type=f32)
    qcb = (q + cb_ref[...]).astype(cdt)    # content stream  (q + cb)
    qpb = (q + pb_ref[...]).astype(cdt)    # position stream (q + pb)

    cos_i = ci_ref[...]                    # (TQ, d/2) f32
    sin_i = si_ref[...]                    # (TQ, d/2) f32
    sin_j = sj_ref[...]                    # (L2, d/2) cdt
    cos_j = cj_ref[...]                    # (L2, d/2) cdt

    # ---- in-kernel position maps: no (L1, L2) HBM arrays --------------------
    row = (jax.lax.broadcasted_iota(jnp.int32, (TQ, L2), 0)
           + pl.program_id(1) * TQ)
    col = jax.lax.broadcasted_iota(jnp.int32, (TQ, L2), 1)
    diag2 = jnp.where(row == col, 2.0, 1.0).astype(f32)   # doubled shift diag
    if causal:
        mask_add = jnp.where(col > row, -1e30, 0.0).astype(f32)

    # short static head loop; only the (TQ, H) head output stays live
    # (written straight to the (TQ, d) VMEM scratch).
    for hh in range(h):
        hs = slice(hh * H, (hh + 1) * H)

        # content term: (q + cb) k^T
        ac = _nt_dot(qcb[:, hs], kb[:, hs])                          # (TQ, L2)

        # position term, exact shift_rows via the angle-difference identity
        #   u . R(j - i) = sin(j*w) . (ue*cos(i*w)+uo*sin(i*w))
        #                + cos(j*w) . (uo*cos(i*w)-ue*sin(i*w))
        ue = jnp.dot(qpb[:, hs], wre_ref[hs, :],
                     preferred_element_type=f32)                     # (TQ, d/2)
        uo = jnp.dot(qpb[:, hs], wro_ref[hs, :],
                     preferred_element_type=f32)                     # (TQ, d/2)
        coef_s = ue * cos_i + uo * sin_i
        coef_c = uo * cos_i - ue * sin_i
        bd = (_nt_dot(coef_s.astype(cdt), sin_j) +
              _nt_dot(coef_c.astype(cdt), cos_j))                    # (TQ, L2)

        logits = ac + bd * diag2
        if causal:
            logits = logits + mask_add

        # softmax (f32; exp on EUP).  Normalization is DEFERRED to the
        # (TQ, H) output instead of scaling the (TQ, L2) score tensor.
        logits = logits - jnp.max(logits, axis=-1, keepdims=True)
        pexp = jnp.exp(logits)
        psum = jnp.sum(pexp, axis=-1, keepdims=True)
        o_h = jnp.dot(pexp.astype(cdt), vb[:, hs],
                      preferred_element_type=f32)                    # (TQ, H)
        if precise:
            o_scr[:, hs] = o_h / psum
        else:
            o_scr[:, hs] = o_h * pl.reciprocal(psum, approx=True)

    # single full-width output projection + residual + LayerNorm
    o_proj = jnp.dot(o_scr[...].astype(cdt), wo_ref[...],
                     preferred_element_type=f32) + wob_ref[...]
    xo = _layernorm(Xq + o_proj, g_ref[...], bln_ref[...])

    if fuse_ffn:
        h1 = jnp.dot(xo.astype(cdt), w1_ref[...],
                     preferred_element_type=f32) + bf1_ref[...]
        h1 = jnp.maximum(h1, 0.0)
        y2 = jnp.dot(h1.astype(cdt), w2_ref[...],
                     preferred_element_type=f32) + bf2_ref[...]
        xo = _layernorm(xo + y2, g2_ref[...], bln2_ref[...])

    out_ref[...] = xo.astype(out_ref.dtype)


# ---------------------------------------------------------------------------
# Wrapper helpers
# ---------------------------------------------------------------------------
def _pick_query_tile(L, tq):
    """Largest TQ <= tq that tiles L and satisfies the (8, 128) sublane rule."""
    if L <= tq:
        return L
    for cand in range(min(tq, L), 0, -1):
        if L % cand == 0 and cand % 8 == 0:
            return cand
    # TODO(synk): pad the query grid with pl.cdiv + in-kernel row masking
    #             instead of falling back to a single full-length tile.
    return L


def _default_vmem_limit():
    """Per-generation scoped-VMEM budget (~100 MiB v5e/v6e, ~52 MiB v7x)."""
    try:
        cap = int(pltpu.get_tpu_info().vmem_capacity_bytes)
        if cap <= 0:
            raise ValueError
    except Exception:
        return 48 * 1024 * 1024
    return min(100 * 1024 * 1024, int(cap * 0.80))


# ---------------------------------------------------------------------------
# Wrapper
# ---------------------------------------------------------------------------
def rel_attention_pallas(X, Y, p, h, *, causal=False, ffn=None, tq=256,
                         compute_dtype=jnp.bfloat16, vmem_limit=None):
    """One RelativeAttention block (optionally with the FeedForwardNet fused)."""
    N, L1, d = X.shape
    L2 = Y.shape[1]
    # TODO(synk): only the L1 == L2 branch of shift_rows is implemented.
    assert L1 == L2, "only the L1 == L2 branch of shift_rows is implemented"
    assert d % h == 0 and d % 2 == 0

    TQ = _pick_query_tile(L1, tq)
    n_qt = L1 // TQ
    half = d // 2
    f32 = jnp.float32
    cdt = compute_dtype
    precise = (compute_dtype == jnp.float32)
    if vmem_limit is None:
        vmem_limit = _default_vmem_limit()

    # --- host-side precompute: sinusoid tables only (O(L*d), no (L,L) maps) --
    inv_freq = 1.0 / (10000.0 ** (np.arange(0, d, 2, dtype=np.float64) / d))
    ang_q = np.arange(L1, dtype=np.float64)[:, None] * inv_freq[None, :]
    ang_k = np.arange(L2, dtype=np.float64)[:, None] * inv_freq[None, :]
    cos_i = jnp.asarray(np.cos(ang_q), f32)          # (L1, d/2)
    sin_i = jnp.asarray(np.sin(ang_q), f32)
    sin_j = jnp.asarray(np.sin(ang_k)).astype(cdt)   # (L2, d/2)
    cos_j = jnp.asarray(np.cos(ang_k)).astype(cdt)

    Wr = p['Wr']
    wre_t = jnp.transpose(Wr[0::2, :]).astype(cdt)   # (d, d/2): even (sin) rows
    wro_t = jnp.transpose(Wr[1::2, :]).astype(cdt)   # (d, d/2): odd  (cos) rows

    # --- K / V projected once per batch element (not per query tile) ---------
    prec = (jax.lax.Precision.HIGHEST if precise else jax.lax.Precision.DEFAULT)
    K = jnp.matmul(Y, p['We'], precision=prec).astype(cdt)    # (N, L2, d)
    V = jnp.matmul(Y, p['Wv'], precision=prec).astype(cdt)    # (N, L2, d)

    operands = [
        X, K, V, cos_i, sin_i, sin_j, cos_j,
        p['Wq'].astype(cdt), wre_t, wro_t, p['cb'], p['pb'],
        p['Wo'].astype(cdt), p['Wob'], p['g'], p['beta'],
    ]
    if ffn is not None:
        operands += [ffn['W1'].astype(cdt), ffn['b1'],
                     ffn['W2'].astype(cdt), ffn['b2'],
                     ffn['g'], ffn['beta']]

    # None in block_shape == pl.Squeezed(): drop the unit batch dim in-kernel.
    def batch_q_spec():
        return pl.BlockSpec((None, TQ, d), lambda b, qt: (b, qt, 0))

    def batch_full_spec():
        return pl.BlockSpec((None, L2, d), lambda b, qt: (b, 0, 0))

    def qrows_spec(cols):
        return pl.BlockSpec((TQ, cols), lambda b, qt: (qt, 0))

    def full_spec(shape):
        nd = len(shape)
        return pl.BlockSpec(shape, lambda b, qt, _nd=nd: (0,) * _nd)

    in_specs = [
        batch_q_spec(),                     # X  (query rows + residual)
        batch_full_spec(),                  # K  (cdt)
        batch_full_spec(),                  # V  (cdt)
        qrows_spec(half),                   # cos(i*w)
        qrows_spec(half),                   # sin(i*w)
        full_spec((L2, half)),              # sin(j*w)
        full_spec((L2, half)),              # cos(j*w)
        full_spec((d, d)),                  # Wq
        full_spec((d, half)),               # Wr even rows (transposed)
        full_spec((d, half)),               # Wr odd rows (transposed)
        full_spec((1, d)), full_spec((1, d)),     # cb, pb
        full_spec((d, d)), full_spec((1, d)),     # Wo, Wob
        full_spec((1, d)), full_spec((1, d)),     # LN gamma, beta
    ]
    if ffn is not None:
        d_ffn = ffn['W1'].shape[1]
        in_specs += [full_spec((d, d_ffn)), full_spec((1, d_ffn)),
                     full_spec((d_ffn, d)), full_spec((1, d)),
                     full_spec((1, d)), full_spec((1, d))]

    kernel = functools.partial(_rel_attn_kernel, h=h, causal=causal,
                               fuse_ffn=ffn is not None, precise=precise)
    return pl.pallas_call(
        kernel,
        out_shape=jax.ShapeDtypeStruct((N, L1, d), f32),
        grid=(N, n_qt),
        in_specs=in_specs,
        out_specs=pl.BlockSpec((None, TQ, d), lambda b, qt: (b, qt, 0)),
        scratch_shapes=[pltpu.VMEM((TQ, d), f32)],
        compiler_params=pltpu.CompilerParams(
            dimension_semantics=("parallel", "parallel"),
            vmem_limit_bytes=vmem_limit),
    )(*operands)


def relative_decoder_block(X, Y, params, h, *, compute_dtype=jnp.bfloat16,
                           tq=256):
    """Pallas implementation of RelativeDecoderBlock.forward (eval mode)."""
    # self-attention: causal mask generated in-kernel (no (L, L) HBM array)
    X1 = rel_attention_pallas(X, X, params['sattn'], h, causal=True,
                              compute_dtype=compute_dtype, tq=tq)
    # cross-attention has no mask (mask add skipped); FFN fused into this call
    return rel_attention_pallas(X1, Y, params['oattn'], h, causal=False,
                                ffn=params['ffn'],
                                compute_dtype=compute_dtype, tq=tq)


# ---------------------------------------------------------------------------
# Pure-JAX reference (mirrors the PyTorch code, eval-mode dropout = identity).
# Matmuls use Precision.HIGHEST so the reference is true f32 on TPU.
# ---------------------------------------------------------------------------
_mm = functools.partial(jnp.matmul, precision=jax.lax.Precision.HIGHEST)


def matrix_r(L, d_model):
    inv_freq = 1.0 / (10000.0 ** (np.arange(0.0, d_model, 2.0) / d_model))
    pos = np.arange(-L + 1.0, L + 0.0)
    sinusoid = np.outer(pos, inv_freq)
    mat = np.zeros((2 * L - 1, d_model), dtype=np.float32)
    mat[:, 0::2] = np.sin(sinusoid)
    mat[:, 1::2] = np.cos(sinusoid)
    return jnp.asarray(mat)


def ref_layernorm(x, g, b, eps=1e-5):
    mu = jnp.mean(x, -1, keepdims=True)
    var = jnp.mean((x - mu) ** 2, -1, keepdims=True)
    return (x - mu) / jnp.sqrt(var + eps) * g + b


def ref_shift_rows(M):
    N, hh, L, _ = M.shape
    M1 = M[..., :L]
    M2 = M[..., L - 1:]
    zero = jnp.zeros((N, hh, L, 1), M.dtype)
    SM1 = jnp.concatenate([zero, M1], -1).reshape(N, hh, -1, L)[:, :, 1:, :]
    SM1 = jnp.tril(SM1, 1)
    SM2 = jnp.concatenate([M2, zero], -1).reshape(N, hh, -1, L)[:, :, :-1, :]
    SM2 = jnp.triu(SM2, 0)
    return SM1 + SM2


def ref_rel_attention(X, Y, mask, p, h):
    N, L1, d = X.shape
    L2 = Y.shape[1]
    H = d // h
    R = matrix_r(L2, d)
    q = _mm(X, p['Wq']).reshape(N, L1, h, H).transpose(0, 2, 1, 3)
    k = _mm(Y, p['We']).reshape(N, L2, h, H).transpose(0, 2, 1, 3)
    v = _mm(Y, p['Wv']).reshape(N, L2, h, H).transpose(0, 2, 1, 3)
    Q = _mm(R, p['Wr']).reshape(1, 2 * L2 - 1, h, H).transpose(0, 2, 1, 3)
    pb = jnp.broadcast_to(p['pb'].reshape(1, h, 1, H), (N, h, L1, H))
    cb = jnp.broadcast_to(p['cb'].reshape(1, h, 1, H), (N, h, L1, H))
    B = _mm(q, jnp.swapaxes(Q, -1, -2))
    D = _mm(pb, jnp.swapaxes(Q, -1, -2))
    A = (_mm(q, jnp.swapaxes(k, -1, -2)) + ref_shift_rows(B)
         + _mm(cb, jnp.swapaxes(k, -1, -2)) + ref_shift_rows(D))
    if mask is not None:
        A = jnp.where(mask == 0, -jnp.inf, A)
    P = jax.nn.softmax(A, axis=-1)
    O = _mm(P, v).transpose(0, 2, 1, 3).reshape(N, L1, d)
    return ref_layernorm(X + _mm(O, p['Wo']) + p['Wob'], p['g'], p['beta'])


def ref_ffn(X, p):
    y = _mm(jnp.maximum(_mm(X, p['W1']) + p['b1'], 0.0), p['W2']) + p['b2']
    return ref_layernorm(X + y, p['g'], p['beta'])


def ref_decoder_block(X, Y, params, h):
    L = X.shape[1]
    self_mask = jnp.tril(jnp.ones((L, L), jnp.float32))      # default_mask(X)
    X1 = ref_rel_attention(X, X, self_mask, params['sattn'], h)
    X2 = ref_rel_attention(X1, Y, None, params['oattn'], h)
    return ref_ffn(X2, params['ffn'])


# ---------------------------------------------------------------------------
# Deterministic parameter initialization (synthetic, matches module shapes)
# ---------------------------------------------------------------------------
def init_params(key, d, d_ffn):
    def attn_params(k):
        ks = jax.random.split(k, 8)
        w = lambda kk: jax.random.normal(kk, (d, d), jnp.float32) / np.sqrt(d)
        return dict(
            Wq=w(ks[0]), We=w(ks[1]), Wv=w(ks[2]), Wr=w(ks[3]),
            cb=0.1 * jax.random.normal(ks[4], (1, d), jnp.float32),
            pb=0.1 * jax.random.normal(ks[5], (1, d), jnp.float32),
            Wo=w(ks[6]),                                  # (in, out) convention
            Wob=0.1 * jax.random.normal(ks[7], (1, d), jnp.float32),
            g=jnp.ones((1, d), jnp.float32),
            beta=jnp.zeros((1, d), jnp.float32),
        )

    k1, k2, k3 = jax.random.split(key, 3)
    kf = jax.random.split(k3, 4)
    ffn = dict(
        W1=jax.random.normal(kf[0], (d, d_ffn), jnp.float32) / np.sqrt(d),
        b1=0.1 * jax.random.normal(kf[1], (1, d_ffn), jnp.float32),
        W2=jax.random.normal(kf[2], (d_ffn, d), jnp.float32) / np.sqrt(d_ffn),
        b2=0.1 * jax.random.normal(kf[3], (1, d), jnp.float32),
        g=jnp.ones((1, d), jnp.float32),
        beta=jnp.zeros((1, d), jnp.float32),
    )
    return dict(sattn=attn_params(k1), oattn=attn_params(k2), ffn=ffn)


# ---------------------------------------------------------------------------
if __name__ == "__main__":
    n_heads, d_model, d_ffn = 4, 32, 64

    key = jax.random.PRNGKey(0)
    kx, ky, kp = jax.random.split(key, 3)
    params = init_params(kp, d_model, d_ffn)

    # ---- tight check: f32 MXU operands, exact divide, larger L, multi-tile --
    # (L=24, tq=8 -> 3 query tiles/batch: exercises the causal-mask row offset,
    #  the doubled-diagonal map and the per-batch K/V path at f32 precision.)
    Nl, Ll = 2, 24
    Xl = jax.random.normal(kx, (Nl, Ll, d_model), jnp.float32)
    Yl = jax.random.normal(ky, (Nl, Ll, d_model), jnp.float32)
    out_f32 = relative_decoder_block(Xl, Yl, params, n_heads,
                                     compute_dtype=jnp.float32, tq=8)
    out_f32 = jax.block_until_ready(out_f32)
    ref_l = ref_decoder_block(Xl, Yl, params, n_heads)
    # f32 everywhere (MXU f32 passes, exact reciprocal) -> tight tolerance.
    np.testing.assert_allclose(np.asarray(out_f32), np.asarray(ref_l),
                               rtol=2e-3, atol=2e-3)

    # ---- production path: bf16 MXU operands, approx reciprocal --------------
    N, L = 2, 8
    X = jax.random.normal(kx, (N, L, d_model), jnp.float32)
    Y = jax.random.normal(ky, (N, L, d_model), jnp.float32)
    out = relative_decoder_block(X, Y, params, n_heads)
    out = jax.block_until_ready(out)
    ref = ref_decoder_block(X, Y, params, n_heads)

    out_np = np.asarray(out)
    assert out_np.shape == (N, L, d_model)
    assert np.all(np.isfinite(out_np))
    # loose tolerance: bf16 matmul operands (f32 accumulation) + approx recip.
    np.testing.assert_allclose(out_np, np.asarray(ref), rtol=1e-1, atol=1e-1)
    print("KERNEL_OK")
</pallas_src>

<mosaic_0001>
module attributes {stable_mosaic.version = 11 : i64} {
  func.func @_rel_attn_kernel(%arg0: i32, %arg1: i32, %arg2: memref<1x8x32xf32, #tpu.memory_space<vmem>>, %arg3: memref<1x24x32xf32, #tpu.memory_space<vmem>>, %arg4: memref<1x24x32xf32, #tpu.memory_space<vmem>>, %arg5: memref<8x16xf32, #tpu.memory_space<vmem>>, %arg6: memref<8x16xf32, #tpu.memory_space<vmem>>, %arg7: memref<24x16xf32, #tpu.memory_space<vmem>>, %arg8: memref<24x16xf32, #tpu.memory_space<vmem>>, %arg9: memref<32x32xf32, #tpu.memory_space<vmem>>, %arg10: memref<32x16xf32, #tpu.memory_space<vmem>>, %arg11: memref<32x16xf32, #tpu.memory_space<vmem>>, %arg12: memref<1x32xf32, #tpu.memory_space<vmem>>, %arg13: memref<1x32xf32, #tpu.memory_space<vmem>>, %arg14: memref<32x32xf32, #tpu.memory_space<vmem>>, %arg15: memref<1x32xf32, #tpu.memory_space<vmem>>, %arg16: memref<1x32xf32, #tpu.memory_space<vmem>>, %arg17: memref<1x32xf32, #tpu.memory_space<vmem>>, %arg18: memref<1x8x32xf32, #tpu.memory_space<vmem>>, %arg19: memref<8x32xf32, #tpu.memory_space<vmem>>) attributes {dimension_semantics = [#tpu.dimension_semantics<parallel>, #tpu.dimension_semantics<parallel>], iteration_bounds = array<i64: 2, 3>, scalar_prefetch = 0 : i64, scratch_operands = 1 : i64, tpu.core_type = #tpu.core_type<tc>, window_params = [{transform_indices = @transform_0, window_bounds = array<i64: 1, 8, 32>}, {transform_indices = @transform_1, window_bounds = array<i64: 1, 24, 32>}, {transform_indices = @transform_2, window_bounds = array<i64: 1, 24, 32>}, {transform_indices = @transform_3, window_bounds = array<i64: 8, 16>}, {transform_indices = @transform_4, window_bounds = array<i64: 8, 16>}, {pipeline_mode = #tpu.pipeline_mode<synchronous>, transform_indices = @transform_5, window_bounds = array<i64: 24, 16>}, {pipeline_mode = #tpu.pipeline_mode<synchronous>, transform_indices = @transform_6, window_bounds = array<i64: 24, 16>}, {pipeline_mode = #tpu.pipeline_mode<synchronous>, transform_indices = @transform_7, window_bounds = array<i64: 32, 32>}, {pipeline_mode = #tpu.pipeline_mode<synchronous>, transform_indices = @transform_8, window_bounds = array<i64: 32, 16>}, {pipeline_mode = #tpu.pipeline_mode<synchronous>, transform_indices = @transform_9, window_bounds = array<i64: 32, 16>}, {pipeline_mode = #tpu.pipeline_mode<synchronous>, transform_indices = @transform_10, window_bounds = array<i64: 1, 32>}, {pipeline_mode = #tpu.pipeline_mode<synchronous>, transform_indices = @transform_11, window_bounds = array<i64: 1, 32>}, {pipeline_mode = #tpu.pipeline_mode<synchronous>, transform_indices = @transform_12, window_bounds = array<i64: 32, 32>}, {pipeline_mode = #tpu.pipeline_mode<synchronous>, transform_indices = @transform_13, window_bounds = array<i64: 1, 32>}, {pipeline_mode = #tpu.pipeline_mode<synchronous>, transform_indices = @transform_14, window_bounds = array<i64: 1, 32>}, {pipeline_mode = #tpu.pipeline_mode<synchronous>, transform_indices = @transform_15, window_bounds = array<i64: 1, 32>}, {transform_indices = @transform_16, window_bounds = array<i64: 1, 8, 32>}]} {
    %c0 = arith.constant 0 : index
    %c0_0 = arith.constant 0 : index
    %c0_1 = arith.constant 0 : index
    %0 = vector.load %arg2[%c0, %c0_0, %c0_1] : memref<1x8x32xf32, #tpu.memory_space<vmem>>, vector<1x8x32xf32>
    %1 = vector.shape_cast %0 : vector<1x8x32xf32> to vector<8x32xf32>
    %c0_2 = arith.constant 0 : index
    %c0_3 = arith.constant 0 : index
    %c0_4 = arith.constant 0 : index
    %2 = vector.load %arg3[%c0_2, %c0_3, %c0_4] : memref<1x24x32xf32, #tpu.memory_space<vmem>>, vector<1x24x32xf32>
    %3 = vector.shape_cast %2 : vector<1x24x32xf32> to vector<24x32xf32>
    %c0_5 = arith.constant 0 : index
    %c0_6 = arith.constant 0 : index
    %c0_7 = arith.constant 0 : index
    %4 = vector.load %arg4[%c0_5, %c0_6, %c0_7] : memref<1x24x32xf32, #tpu.memory_space<vmem>>, vector<1x24x32xf32>
    %5 = vector.shape_cast %4 : vector<1x24x32xf32> to vector<24x32xf32>
    %c0_8 = arith.constant 0 : index
    %c0_9 = arith.constant 0 : index
    %6 = vector.load %arg9[%c0_8, %c0_9] : memref<32x32xf32, #tpu.memory_space<vmem>>, vector<32x32xf32>
    %cst = arith.constant dense<0.000000e+00> : vector<8x32xf32>
    %7 = tpu.matmul %1, %6, %cst {dimension_numbers = #tpu.dot_dimension_numbers<[1], [0], [0], [1], [0, 0, 1, 1], [], []>} : vector<8x32xf32>, vector<32x32xf32>, vector<8x32xf32> -> vector<8x32xf32>
    %c0_10 = arith.constant 0 : index
    %c0_11 = arith.constant 0 : index
    %8 = vector.load %arg12[%c0_10, %c0_11] : memref<1x32xf32, #tpu.memory_space<vmem>>, vector<1x32xf32>
    %9 = vector.broadcast %8 : vector<1x32xf32> to vector<8x32xf32>
    %10 = arith.addf %7, %9 : vector<8x32xf32>
    %c0_12 = arith.constant 0 : index
    %c0_13 = arith.constant 0 : index
    %11 = vector.load %arg13[%c0_12, %c0_13] : memref<1x32xf32, #tpu.memory_space<vmem>>, vector<1x32xf32>
    %12 = vector.broadcast %11 : vector<1x32xf32> to vector<8x32xf32>
    %13 = arith.addf %7, %12 : vector<8x32xf32>
    %c0_14 = arith.constant 0 : index
    %c0_15 = arith.constant 0 : index
    %14 = vector.load %arg5[%c0_14, %c0_15] : memref<8x16xf32, #tpu.memory_space<vmem>>, vector<8x16xf32>
    %c0_16 = arith.constant 0 : index
    %c0_17 = arith.constant 0 : index
    %15 = vector.load %arg6[%c0_16, %c0_17] : memref<8x16xf32, #tpu.memory_space<vmem>>, vector<8x16xf32>
    %c0_18 = arith.constant 0 : index
    %c0_19 = arith.constant 0 : index
    %16 = vector.load %arg7[%c0_18, %c0_19] : memref<24x16xf32, #tpu.memory_space<vmem>>, vector<24x16xf32>
    %c0_20 = arith.constant 0 : index
    %c0_21 = arith.constant 0 : index
    %17 = vector.load %arg8[%c0_20, %c0_21] : memref<24x16xf32, #tpu.memory_space<vmem>>, vector<24x16xf32>
    %18 = tpu.iota {dimensions = array<i32: 0>} : vector<8x24xi32>
    %c8_i32 = arith.constant 8 : i32
    %19 = arith.muli %arg1, %c8_i32 : i32
    %20 = vector.broadcast %19 : i32 to vector<8x24xi32>
    %21 = arith.addi %18, %20 : vector<8x24xi32>
    %22 = tpu.iota {dimensions = array<i32: 1>} : vector<8x24xi32>
    %23 = arith.cmpi eq, %21, %22 : vector<8x24xi32>
    %cst_22 = arith.constant 2.000000e+00 : f32
    %cst_23 = arith.constant 1.000000e+00 : f32
    %24 = vector.broadcast %cst_22 : f32 to vector<8x24xf32>
    %25 = vector.broadcast %cst_23 : f32 to vector<8x24xf32>
    %26 = arith.select %23, %24, %25 : vector<8x24xi1>, vector<8x24xf32>
    %27 = arith.cmpi sgt, %22, %21 : vector<8x24xi32>
    %cst_24 = arith.constant -1.000000e+30 : f32
    %cst_25 = arith.constant 0.000000e+00 : f32
    %28 = vector.broadcast %cst_24 : f32 to vector<8x24xf32>
    %29 = vector.broadcast %cst_25 : f32 to vector<8x24xf32>
    %30 = arith.select %27, %28, %29 : vector<8x24xi1>, vector<8x24xf32>
    %31 = vector.extract_strided_slice %10 {offsets = [0, 0], sizes = [8, 8], strides = [1, 1]} : vector<8x32xf32> to vector<8x8xf32>
    %32 = vector.extract_strided_slice %3 {offsets = [0, 0], sizes = [24, 8], strides = [1, 1]} : vector<24x32xf32> to vector<24x8xf32>
    %cst_26 = arith.constant dense<0.000000e+00> : vector<8x24xf32>
    %33 = tpu.matmul %31, %32, %cst_26 {dimension_numbers = #tpu.dot_dimension_numbers<[1], [1], [0], [0], [0, 0, 1, 0], [], []>} : vector<8x8xf32>, vector<24x8xf32>, vector<8x24xf32> -> vector<8x24xf32>
    %34 = vector.extract_strided_slice %13 {offsets = [0, 0], sizes = [8, 8], strides = [1, 1]} : vector<8x32xf32> to vector<8x8xf32>
    %c0_27 = arith.constant 0 : index
    %c0_28 = arith.constant 0 : index
    %35 = vector.load %arg10[%c0_27, %c0_28] : memref<32x16xf32, #tpu.memory_space<vmem>>, vector<8x16xf32>
    %cst_29 = arith.constant dense<0.000000e+00> : vector<8x16xf32>
    %36 = tpu.matmul %34, %35, %cst_29 {dimension_numbers = #tpu.dot_dimension_numbers<[1], [0], [0], [1], [0, 0, 1, 1], [], []>} : vector<8x8xf32>, vector<8x16xf32>, vector<8x16xf32> -> vector<8x16xf32>
    %37 = vector.extract_strided_slice %13 {offsets = [0, 0], sizes = [8, 8], strides = [1, 1]} : vector<8x32xf32> to vector<8x8xf32>
    %c0_30 = arith.constant 0 : index
    %c0_31 = arith.constant 0 : index
    %38 = vector.load %arg11[%c0_30, %c0_31] : memref<32x16xf32, #tpu.memory_space<vmem>>, vector<8x16xf32>
    %cst_32 = arith.constant dense<0.000000e+00> : vector<8x16xf32>
    %39 = tpu.matmul %37, %38, %cst_32 {dimension_numbers = #tpu.dot_dimension_numbers<[1], [0], [0], [1], [0, 0, 1, 1], [], []>} : vector<8x8xf32>, vector<8x16xf32>, vector<8x16xf32> -> vector<8x16xf32>
    %40 = arith.mulf %36, %14 : vector<8x16xf32>
    %41 = arith.mulf %39, %15 : vector<8x16xf32>
    %42 = arith.addf %40, %41 : vector<8x16xf32>
    %43 = arith.mulf %39, %14 : vector<8x16xf32>
    %44 = arith.mulf %36, %15 : vector<8x16xf32>
    %45 = arith.subf %43, %44 : vector<8x16xf32>
    %cst_33 = arith.constant dense<0.000000e+00> : vector<8x24xf32>
    %46 = tpu.matmul %42, %16, %cst_33 {dimension_numbers = #tpu.dot_dimension_numbers<[1], [1], [0], [0], [0, 0, 1, 0], [], []>} : vector<8x16xf32>, vector<24x16xf32>, vector<8x24xf32> -> vector<8x24xf32>
    %cst_34 = arith.constant dense<0.000000e+00> : vector<8x24xf32>
    %47 = tpu.matmul %45, %17, %cst_34 {dimension_numbers = #tpu.dot_dimension_numbers<[1], [1], [0], [0], [0, 0, 1, 0], [], []>} : vector<8x16xf32>, vector<24x16xf32>, vector<8x24xf32> -> vector<8x24xf32>
    %48 = arith.addf %46, %47 : vector<8x24xf32>
    %49 = arith.mulf %48, %26 : vector<8x24xf32>
    %50 = arith.addf %33, %49 : vector<8x24xf32>
    %51 = arith.addf %50, %30 : vector<8x24xf32>
    %cst_35 = arith.constant dense<0xFF800000> : vector<8xf32>
    %52 = vector.multi_reduction <maximumf>, %51, %cst_35 [1] : vector<8x24xf32> to vector<8xf32>
    %53 = vector.shape_cast %52 : vector<8xf32> to vector<8x1xf32>
    %54 = vector.broadcast %53 : vector<8x1xf32> to vector<8x24xf32>
    %55 = arith.subf %51, %54 : vector<8x24xf32>
    %56 = math.exp %55 : vector<8x24xf32>
    %cst_36 = arith.constant dense<0.000000e+00> : vector<8xf32>
    %57 = vector.multi_reduction <add>, %56, %cst_36 [1] : vector<8x24xf32> to vector<8xf32>
    %58 = vector.shape_cast %57 : vector<8xf32> to vector<8x1xf32>
    %59 = vector.extract_strided_slice %5 {offsets = [0, 0], sizes = [24, 8], strides = [1, 1]} : vector<24x32xf32> to vector<24x8xf32>
    %cst_37 = arith.constant dense<0.000000e+00> : vector<8x8xf32>
    %60 = tpu.matmul %56, %59, %cst_37 {dimension_numbers = #tpu.dot_dimension_numbers<[1], [0], [0], [1], [0, 0, 1, 1], [], []>} : vector<8x24xf32>, vector<24x8xf32>, vector<8x8xf32> -> vector<8x8xf32>
    %61 = vector.broadcast %58 : vector<8x1xf32> to vector<8x8xf32>
    %62 = arith.divf %60, %61 : vector<8x8xf32>
    %c0_38 = arith.constant 0 : index
    %c0_39 = arith.constant 0 : index
    %63 = vector.load %arg19[%c0_38, %c0_39] : memref<8x32xf32, #tpu.memory_space<vmem>>, vector<8x8xf32>
    tpu.vector_store %arg19[%c0_38, %c0_39], %62 {strides = array<i32>} : memref<8x32xf32, #tpu.memory_space<vmem>>, vector<8x8xf32>,
    %64 = vector.extract_strided_slice %10 {offsets = [0, 8], sizes = [8, 8], strides = [1, 1]} : vector<8x32xf32> to vector<8x8xf32>
    %65 = vector.extract_strided_slice %3 {offsets = [0, 8], sizes = [24, 8], strides = [1, 1]} : vector<24x32xf32> to vector<24x8xf32>
    %cst_40 = arith.constant dense<0.000000e+00> : vector<8x24xf32>
    %66 = tpu.matmul %64, %65, %cst_40 {dimension_numbers = #tpu.dot_dimension_numbers<[1], [1], [0], [0], [0, 0, 1, 0], [], []>} : vector<8x8xf32>, vector<24x8xf32>, vector<8x24xf32> -> vector<8x24xf32>
    %67 = vector.extract_strided_slice %13 {offsets = [0, 8], sizes = [8, 8], strides = [1, 1]} : vector<8x32xf32> to vector<8x8xf32>
    %c8 = arith.constant 8 : index
    %c0_41 = arith.constant 0 : index
    %68 = vector.load %arg10[%c8, %c0_41] : memref<32x16xf32, #tpu.memory_space<vmem>>, vector<8x16xf32>
    %cst_42 = arith.constant dense<0.000000e+00> : vector<8x16xf32>
    %69 = tpu.matmul %67, %68, %cst_42 {dimension_numbers = #tpu.dot_dimension_numbers<[1], [0], [0], [1], [0, 0, 1, 1], [], []>} : vector<8x8xf32>, vector<8x16xf32>, vector<8x16xf32> -> vector<8x16xf32>
    %70 = vector.extract_strided_slice %13 {offsets = [0, 8], sizes = [8, 8], strides = [1, 1]} : vector<8x32xf32> to vector<8x8xf32>
    %c8_43 = arith.constant 8 : index
    %c0_44 = arith.constant 0 : index
    %71 = vector.load %arg11[%c8_43, %c0_44] : memref<32x16xf32, #tpu.memory_space<vmem>>, vector<8x16xf32>
    %cst_45 = arith.constant dense<0.000000e+00> : vector<8x16xf32>
    %72 = tpu.matmul %70, %71, %cst_45 {dimension_numbers = #tpu.dot_dimension_numbers<[1], [0], [0], [1], [0, 0, 1, 1], [], []>} : vector<8x8xf32>, vector<8x16xf32>, vector<8x16xf32> -> vector<8x16xf32>
    %73 = arith.mulf %69, %14 : vector<8x16xf32>
    %74 = arith.mulf %72, %15 : vector<8x16xf32>
    %75 = arith.addf %73, %74 : vector<8x16xf32>
    %76 = arith.mulf %72, %14 : vector<8x16xf32>
    %77 = arith.mulf %69, %15 : vector<8x16xf32>
    %78 = arith.subf %76, %77 : vector<8x16xf32>
    %cst_46 = arith.constant dense<0.000000e+00> : vector<8x24xf32>
    %79 = tpu.matmul %75, %16, %cst_46 {dimension_numbers = #tpu.dot_dimension_numbers<[1], [1], [0], [0], [0, 0, 1, 0], [], []>} : vector<8x16xf32>, vector<24x16xf32>, vector<8x24xf32> -> vector<8x24xf32>
    %cst_47 = arith.constant dense<0.000000e+00> : vector<8x24xf32>
    %80 = tpu.matmul %78, %17, %cst_47 {dimension_numbers = #tpu.dot_dimension_numbers<[1], [1], [0], [0], [0, 0, 1, 0], [], []>} : vector<8x16xf32>, vector<24x16xf32>, vector<8x24xf32> -> vector<8x24xf32>
    %81 = arith.addf %79, %80 : vector<8x24xf32>
    %82 = arith.mulf %81, %26 : vector<8x24xf32>
    %83 = arith.addf %66, %82 : vector<8x24xf32>
    %84 = arith.addf %83, %30 : vector<8x24xf32>
    %cst_48 = arith.constant dense<0xFF800000> : vector<8xf32>
    %85 = vector.multi_reduction <maximumf>, %84, %cst_48 [1] : vector<8x24xf32> to vector<8xf32>
    %86 = vector.shape_cast %85 : vector<8xf32> to vector<8x1xf32>
    %87 = vector.broadcast %86 : vector<8x1xf32> to vector<8x24xf32>
    %88 = arith.subf %84, %87 : vector<8x24xf32>
    %89 = math.exp %88 : vector<8x24xf32>
    %cst_49 = arith.constant dense<0.000000e+00> : vector<8xf32>
    %90 = vector.multi_reduction <add>, %89, %cst_49 [1] : vector<8x24xf32> to vector<8xf32>
    %91 = vector.shape_cast %90 : vector<8xf32> to vector<8x1xf32>
    %92 = vector.extract_strided_slice %5 {offsets = [0, 8], sizes = [24, 8], strides = [1, 1]} : vector<24x32xf32> to vector<24x8xf32>
    %cst_50 = arith.constant dense<0.000000e+00> : vector<8x8xf32>
    %93 = tpu.matmul %89, %92, %cst_50 {dimension_numbers = #tpu.dot_dimension_numbers<[1], [0], [0], [1], [0, 0, 1, 1], [], []>} : vector<8x24xf32>, vector<24x8xf32>, vector<8x8xf32> -> vector<8x8xf32>
    %94 = vector.broadcast %91 : vector<8x1xf32> to vector<8x8xf32>
    %95 = arith.divf %93, %94 : vector<8x8xf32>
    %c0_51 = arith.constant 0 : index
    %c8_52 = arith.constant 8 : index
    %96 = vector.load %arg19[%c0_51, %c8_52] : memref<8x32xf32, #tpu.memory_space<vmem>>, vector<8x8xf32>
    tpu.vector_store %arg19[%c0_51, %c8_52], %95 {strides = array<i32>} : memref<8x32xf32, #tpu.memory_space<vmem>>, vector<8x8xf32>,
    %97 = vector.extract_strided_slice %10 {offsets = [0, 16], sizes = [8, 8], strides = [1, 1]} : vector<8x32xf32> to vector<8x8xf32>
    %98 = vector.extract_strided_slice %3 {offsets = [0, 16], sizes = [24, 8], strides = [1, 1]} : vector<24x32xf32> to vector<24x8xf32>
    %cst_53 = arith.constant dense<0.000000e+00> : vector<8x24xf32>
    %99 = tpu.matmul %97, %98, %cst_53 {dimension_numbers = #tpu.dot_dimension_numbers<[1], [1], [0], [0], [0, 0, 1, 0], [], []>} : vector<8x8xf32>, vector<24x8xf32>, vector<8x24xf32> -> vector<8x24xf32>
    %100 = vector.extract_strided_slice %13 {offsets = [0, 16], sizes = [8, 8], strides = [1, 1]} : vector<8x32xf32> to vector<8x8xf32>
    %c16 = arith.constant 16 : index
    %c0_54 = arith.constant 0 : index
    %101 = vector.load %arg10[%c16, %c0_54] : memref<32x16xf32, #tpu.memory_space<vmem>>, vector<8x16xf32>
    %cst_55 = arith.constant dense<0.000000e+00> : vector<8x16xf32>
    %102 = tpu.matmul %100, %101, %cst_55 {dimension_numbers = #tpu.dot_dimension_numbers<[1], [0], [0], [1], [0, 0, 1, 1], [], []>} : vector<8x8xf32>, vector<8x16xf32>, vector<8x16xf32> -> vector<8x16xf32>
    %103 = vector.extract_strided_slice %13 {offsets = [0, 16], sizes = [8, 8], strides = [1, 1]} : vector<8x32xf32> to vector<8x8xf32>
    %c16_56 = arith.constant 16 : index
    %c0_57 = arith.constant 0 : index
    %104 = vector.load %arg11[%c16_56, %c0_57] : memref<32x16xf32, #tpu.memory_space<vmem>>, vector<8x16xf32>
    %cst_58 = arith.constant dense<0.000000e+00> : vector<8x16xf32>
    %105 = tpu.matmul %103, %104, %cst_58 {dimension_numbers = #tpu.dot_dimension_numbers<[1], [0], [0], [1], [0, 0, 1, 1], [], []>} : vector<8x8xf32>, vector<8x16xf32>, vector<8x16xf32> -> vector<8x16xf32>
    %106 = arith.mulf %102, %14 : vector<8x16xf32>
    %107 = arith.mulf %105, %15 : vector<8x16xf32>
    %108 = arith.addf %106, %107 : vector<8x16xf32>
    %109 = arith.mulf %105, %14 : vector<8x16xf32>
    %110 = arith.mulf %102, %15 : vector<8x16xf32>
    %111 = arith.subf %109, %110 : vector<8x16xf32>
    %cst_59 = arith.constant dense<0.000000e+00> : vector<8x24xf32>
    %112 = tpu.matmul %108, %16, %cst_59 {dimension_numbers = #tpu.dot_dimension_numbers<[1], [1], [0], [0], [0, 0, 1, 0], [], []>} : vector<8x16xf32>, vector<24x16xf32>, vector<8x24xf32> -> vector<8x24xf32>
    %cst_60 = arith.constant dense<0.000000e+00> : vector<8x24xf32>
    %113 = tpu.matmul %111, %17, %cst_60 {dimension_numbers = #tpu.dot_dimension_numbers<[1], [1], [0], [0], [0, 0, 1, 0], [], []>} : vector<8x16xf32>, vector<24x16xf32>, vector<8x24xf32> -> vector<8x24xf32>
    %114 = arith.addf %112, %113 : vector<8x24xf32>
    %115 = arith.mulf %114, %26 : vector<8x24xf32>
    %116 = arith.addf %99, %115 : vector<8x24xf32>
    %117 = arith.addf %116, %30 : vector<8x24xf32>
    %cst_61 = arith.constant dense<0xFF800000> : vector<8xf32>
    %118 = vector.multi_reduction <maximumf>, %117, %cst_61 [1] : vector<8x24xf32> to vector<8xf32>
    %119 = vector.shape_cast %118 : vector<8xf32> to vector<8x1xf32>
    %120 = vector.broadcast %119 : vector<8x1xf32> to vector<8x24xf32>
    %121 = arith.subf %117, %120 : vector<8x24xf32>
    %122 = math.exp %121 : vector<8x24xf32>
    %cst_62 = arith.constant dense<0.000000e+00> : vector<8xf32>
    %123 = vector.multi_reduction <add>, %122, %cst_62 [1] : vector<8x24xf32> to vector<8xf32>
    %124 = vector.shape_cast %123 : vector<8xf32> to vector<8x1xf32>
    %125 = vector.extract_strided_slice %5 {offsets = [0, 16], sizes = [24, 8], strides = [1, 1]} : vector<24x32xf32> to vector<24x8xf32>
    %cst_63 = arith.constant dense<0.000000e+00> : vector<8x8xf32>
    %126 = tpu.matmul %122, %125, %cst_63 {dimension_numbers = #tpu.dot_dimension_numbers<[1], [0], [0], [1], [0, 0, 1, 1], [], []>} : vector<8x24xf32>, vector<24x8xf32>, vector<8x8xf32> -> vector<8x8xf32>
    %127 = vector.broadcast %124 : vector<8x1xf32> to vector<8x8xf32>
    %128 = arith.divf %126, %127 : vector<8x8xf32>
    %c0_64 = arith.constant 0 : index
    %c16_65 = arith.constant 16 : index
    %129 = vector.load %arg19[%c0_64, %c16_65] : memref<8x32xf32, #tpu.memory_space<vmem>>, vector<8x8xf32>
    tpu.vector_store %arg19[%c0_64, %c16_65], %128 {strides = array<i32>} : memref<8x32xf32, #tpu.memory_space<vmem>>, vector<8x8xf32>,
    %130 = vector.extract_strided_slice %10 {offsets = [0, 24], sizes = [8, 8], strides = [1, 1]} : vector<8x32xf32> to vector<8x8xf32>
    %131 = vector.extract_strided_slice %3 {offsets = [0, 24], sizes = [24, 8], strides = [1, 1]} : vector<24x32xf32> to vector<24x8xf32>
    %cst_66 = arith.constant dense<0.000000e+00> : vector<8x24xf32>
    %132 = tpu.matmul %130, %131, %cst_66 {dimension_numbers = #tpu.dot_dimension_numbers<[1], [1], [0], [0], [0, 0, 1, 0], [], []>} : vector<8x8xf32>, vector<24x8xf32>, vector<8x24xf32> -> vector<8x24xf32>
    %133 = vector.extract_strided_slice %13 {offsets = [0, 24], sizes = [8, 8], strides = [1, 1]} : vector<8x32xf32> to vector<8x8xf32>
    %c24 = arith.constant 24 : index
    %c0_67 = arith.constant 0 : index
    %134 = vector.load %arg10[%c24, %c0_67] : memref<32x16xf32, #tpu.memory_space<vmem>>, vector<8x16xf32>
    %cst_68 = arith.constant dense<0.000000e+00> : vector<8x16xf32>
    %135 = tpu.matmul %133, %134, %cst_68 {dimension_numbers = #tpu.dot_dimension_numbers<[1], [0], [0], [1], [0, 0, 1, 1], [], []>} : vector<8x8xf32>, vector<8x16xf32>, vector<8x16xf32> -> vector<8x16xf32>
    %136 = vector.extract_strided_slice %13 {offsets = [0, 24], sizes = [8, 8], strides = [1, 1]} : vector<8x32xf32> to vector<8x8xf32>
    %c24_69 = arith.constant 24 : index
    %c0_70 = arith.constant 0 : index
    %137 = vector.load %arg11[%c24_69, %c0_70] : memref<32x16xf32, #tpu.memory_space<vmem>>, vector<8x16xf32>
    %cst_71 = arith.constant dense<0.000000e+00> : vector<8x16xf32>
    %138 = tpu.matmul %136, %137, %cst_71 {dimension_numbers = #tpu.dot_dimension_numbers<[1], [0], [0], [1], [0, 0, 1, 1], [], []>} : vector<8x8xf32>, vector<8x16xf32>, vector<8x16xf32> -> vector<8x16xf32>
    %139 = arith.mulf %135, %14 : vector<8x16xf32>
    %140 = arith.mulf %138, %15 : vector<8x16xf32>
    %141 = arith.addf %139, %140 : vector<8x16xf32>
    %142 = arith.mulf %138, %14 : vector<8x16xf32>
    %143 = arith.mulf %135, %15 : vector<8x16xf32>
    %144 = arith.subf %142, %143 : vector<8x16xf32>
    %cst_72 = arith.constant dense<0.000000e+00> : vector<8x24xf32>
    %145 = tpu.matmul %141, %16, %cst_72 {dimension_numbers = #tpu.dot_dimension_numbers<[1], [1], [0], [0], [0, 0, 1, 0], [], []>} : vector<8x16xf32>, vector<24x16xf32>, vector<8x24xf32> -> vector<8x24xf32>
    %cst_73 = arith.constant dense<0.000000e+00> : vector<8x24xf32>
    %146 = tpu.matmul %144, %17, %cst_73 {dimension_numbers = #tpu.dot_dimension_numbers<[1], [1], [0], [0], [0, 0, 1, 0], [], []>} : vector<8x16xf32>, vector<24x16xf32>, vector<8x24xf32> -> vector<8x24xf32>
    %147 = arith.addf %145, %146 : vector<8x24xf32>
    %148 = arith.mulf %147, %26 : vector<8x24xf32>
    %149 = arith.addf %132, %148 : vector<8x24xf32>
    %150 = arith.addf %149, %30 : vector<8x24xf32>
    %cst_74 = arith.constant dense<0xFF800000> : vector<8xf32>
    %151 = vector.multi_reduction <maximumf>, %150, %cst_74 [1] : vector<8x24xf32> to vector<8xf32>
    %152 = vector.shape_cast %151 : vector<8xf32> to vector<8x1xf32>
    %153 = vector.broadcast %152 : vector<8x1xf32> to vector<8x24xf32>
    %154 = arith.subf %150, %153 : vector<8x24xf32>
    %155 = math.exp %154 : vector<8x24xf32>
    %cst_75 = arith.constant dense<0.000000e+00> : vector<8xf32>
    %156 = vector.multi_reduction <add>, %155, %cst_75 [1] : vector<8x24xf32> to vector<8xf32>
    %157 = vector.shape_cast %156 : vector<8xf32> to vector<8x1xf32>
    %158 = vector.extract_strided_slice %5 {offsets = [0, 24], sizes = [24, 8], strides = [1, 1]} : vector<24x32xf32> to vector<24x8xf32>
    %cst_76 = arith.constant dense<0.000000e+00> : vector<8x8xf32>
    %159 = tpu.matmul %155, %158, %cst_76 {dimension_numbers = #tpu.dot_dimension_numbers<[1], [0], [0], [1], [0, 0, 1, 1], [], []>} : vector<8x24xf32>, vector<24x8xf32>, vector<8x8xf32> -> vector<8x8xf32>
    %160 = vector.broadcast %157 : vector<8x1xf32> to vector<8x8xf32>
    %161 = arith.divf %159, %160 : vector<8x8xf32>
    %c0_77 = arith.constant 0 : index
    %c24_78 = arith.constant 24 : index
    %162 = vector.load %arg19[%c0_77, %c24_78] : memref<8x32xf32, #tpu.memory_space<vmem>>, vector<8x8xf32>
    tpu.vector_store %arg19[%c0_77, %c24_78], %161 {strides = array<i32>} : memref<8x32xf32, #tpu.memory_space<vmem>>, vector<8x8xf32>,
    %c0_79 = arith.constant 0 : index
    %c0_80 = arith.constant 0 : index
    %163 = vector.load %arg19[%c0_79, %c0_80] : memref<8x32xf32, #tpu.memory_space<vmem>>, vector<8x32xf32>
    %c0_81 = arith.constant 0 : index
    %c0_82 = arith.constant 0 : index
    %164 = vector.load %arg14[%c0_81, %c0_82] : memref<32x32xf32, #tpu.memory_space<vmem>>, vector<32x32xf32>
    %cst_83 = arith.constant dense<0.000000e+00> : vector<8x32xf32>
    %165 = tpu.matmul %163, %164, %cst_83 {dimension_numbers = #tpu.dot_dimension_numbers<[1], [0], [0], [1], [0, 0, 1, 1], [], []>} : vector<8x32xf32>, vector<32x32xf32>, vector<8x32xf32> -> vector<8x32xf32>
    %c0_84 = arith.constant 0 : index
    %c0_85 = arith.constant 0 : index
    %166 = vector.load %arg15[%c0_84, %c0_85] : memref<1x32xf32, #tpu.memory_space<vmem>>, vector<1x32xf32>
    %167 = vector.broadcast %166 : vector<1x32xf32> to vector<8x32xf32>
    %168 = arith.addf %165, %167 : vector<8x32xf32>
    %169 = arith.addf %1, %168 : vector<8x32xf32>
    %c0_86 = arith.constant 0 : index
    %c0_87 = arith.constant 0 : index
    %170 = vector.load %arg16[%c0_86, %c0_87] : memref<1x32xf32, #tpu.memory_space<vmem>>, vector<1x32xf32>
    %c0_88 = arith.constant 0 : index
    %c0_89 = arith.constant 0 : index
    %171 = vector.load %arg17[%c0_88, %c0_89] : memref<1x32xf32, #tpu.memory_space<vmem>>, vector<1x32xf32>
    %cst_90 = arith.constant dense<0.000000e+00> : vector<8xf32>
    %172 = vector.multi_reduction <add>, %169, %cst_90 [1] : vector<8x32xf32> to vector<8xf32>
    %173 = vector.shape_cast %172 : vector<8xf32> to vector<8x1xf32>
    %cst_91 = arith.constant 3.200000e+01 : f32
    %174 = vector.broadcast %cst_91 : f32 to vector<8x1xf32>
    %175 = arith.divf %173, %174 : vector<8x1xf32>
    %176 = vector.broadcast %175 : vector<8x1xf32> to vector<8x32xf32>
    %177 = arith.subf %169, %176 : vector<8x32xf32>
    %178 = arith.mulf %177, %177 : vector<8x32xf32>
    %cst_92 = arith.constant dense<0.000000e+00> : vector<8xf32>
    %179 = vector.multi_reduction <add>, %178, %cst_92 [1] : vector<8x32xf32> to vector<8xf32>
    %180 = vector.shape_cast %179 : vector<8xf32> to vector<8x1xf32>
    %cst_93 = arith.constant 3.200000e+01 : f32
    %181 = vector.broadcast %cst_93 : f32 to vector<8x1xf32>
    %182 = arith.divf %180, %181 : vector<8x1xf32>
    %183 = vector.broadcast %175 : vector<8x1xf32> to vector<8x32xf32>
    %184 = arith.subf %169, %183 : vector<8x32xf32>
    %cst_94 = arith.constant 9.99999974E-6 : f32
    %185 = vector.broadcast %cst_94 : f32 to vector<8x1xf32>
    %186 = arith.addf %182, %185 : vector<8x1xf32>
    %187 = math.rsqrt %186 : vector<8x1xf32>
    %188 = vector.broadcast %187 : vector<8x1xf32> to vector<8x32xf32>
    %189 = arith.mulf %184, %188 : vector<8x32xf32>
    %190 = vector.broadcast %170 : vector<1x32xf32> to vector<8x32xf32>
    %191 = arith.mulf %189, %190 : vector<8x32xf32>
    %192 = vector.broadcast %171 : vector<1x32xf32> to vector<8x32xf32>
    %193 = arith.addf %191, %192 : vector<8x32xf32>
    %c0_95 = arith.constant 0 : index
    %c0_96 = arith.constant 0 : index
    %c0_97 = arith.constant 0 : index
    %194 = vector.load %arg18[%c0_95, %c0_96, %c0_97] : memref<1x8x32xf32, #tpu.memory_space<vmem>>, vector<1x8x32xf32>
    %195 = vector.shape_cast %194 : vector<1x8x32xf32> to vector<8x32xf32>
    %196 = vector.shape_cast %193 : vector<8x32xf32> to vector<1x8x32xf32>
    tpu.vector_store %arg18[%c0_95, %c0_96, %c0_97], %196 {strides = array<i32>} : memref<1x8x32xf32, #tpu.memory_space<vmem>>, vector<1x8x32xf32>,
    return
  }
  func.func @transform_0(%arg0: i32, %arg1: i32) -> (i32, i32, i32) {
    %c0_i32 = arith.constant 0 : i32
    %c0_i32_0 = arith.constant 0 : i32
    return %arg0, %arg1, %c0_i32 : i32, i32, i32
  }
  func.func @transform_1(%arg0: i32, %arg1: i32) -> (i32, i32, i32) {
    %c0_i32 = arith.constant 0 : i32
    %c0_i32_0 = arith.constant 0 : i32
    %c0_i32_1 = arith.constant 0 : i32
    return %arg0, %c0_i32, %c0_i32_0 : i32, i32, i32
  }
  func.func @transform_2(%arg0: i32, %arg1: i32) -> (i32, i32, i32) {
    %c0_i32 = arith.constant 0 : i32
    %c0_i32_0 = arith.constant 0 : i32
    %c0_i32_1 = arith.constant 0 : i32
    return %arg0, %c0_i32, %c0_i32_0 : i32, i32, i32
  }
  func.func @transform_3(%arg0: i32, %arg1: i32) -> (i32, i32) {
    %c0_i32 = arith.constant 0 : i32
    %c0_i32_0 = arith.constant 0 : i32
    return %arg1, %c0_i32 : i32, i32
  }
  func.func @transform_4(%arg0: i32, %arg1: i32) -> (i32, i32) {
    %c0_i32 = arith.constant 0 : i32
    %c0_i32_0 = arith.constant 0 : i32
    return %arg1, %c0_i32 : i32, i32
  }
  func.func @transform_5(%arg0: i32, %arg1: i32) -> (i32, i32) {
    %c0_i32 = arith.constant 0 : i32
    %c0_i32_0 = arith.constant 0 : i32
    %c0_i32_1 = arith.constant 0 : i32
    return %c0_i32, %c0_i32_0 : i32, i32
  }
  func.func @transform_6(%arg0: i32, %arg1: i32) -> (i32, i32) {
    %c0_i32 = arith.constant 0 : i32
    %c0_i32_0 = arith.constant 0 : i32
    %c0_i32_1 = arith.constant 0 : i32
    return %c0_i32, %c0_i32_0 : i32, i32
  }
  func.func @transform_7(%arg0: i32, %arg1: i32) -> (i32, i32) {
    %c0_i32 = arith.constant 0 : i32
    %c0_i32_0 = arith.constant 0 : i32
    %c0_i32_1 = arith.constant 0 : i32
    return %c0_i32, %c0_i32_0 : i32, i32
  }
  func.func @transform_8(%arg0: i32, %arg1: i32) -> (i32, i32) {
    %c0_i32 = arith.constant 0 : i32
    %c0_i32_0 = arith.constant 0 : i32
    %c0_i32_1 = arith.constant 0 : i32
    return %c0_i32, %c0_i32_0 : i32, i32
  }
  func.func @transform_9(%arg0: i32, %arg1: i32) -> (i32, i32) {
    %c0_i32 = arith.constant 0 : i32
    %c0_i32_0 = arith.constant 0 : i32
    %c0_i32_1 = arith.constant 0 : i32
    return %c0_i32, %c0_i32_0 : i32, i32
  }
  func.func @transform_10(%arg0: i32, %arg1: i32) -> (i32, i32) {
    %c0_i32 = arith.constant 0 : i32
    %c0_i32_0 = arith.constant 0 : i32
    %c0_i32_1 = arith.constant 0 : i32
    return %c0_i32, %c0_i32_0 : i32, i32
  }
  func.func @transform_11(%arg0: i32, %arg1: i32) -> (i32, i32) {
    %c0_i32 = arith.constant 0 : i32
    %c0_i32_0 = arith.constant 0 : i32
    %c0_i32_1 = arith.constant 0 : i32
    return %c0_i32, %c0_i32_0 : i32, i32
  }
  func.func @transform_12(%arg0: i32, %arg1: i32) -> (i32, i32) {
    %c0_i32 = arith.constant 0 : i32
    %c0_i32_0 = arith.constant 0 : i32
    %c0_i32_1 = arith.constant 0 : i32
    return %c0_i32, %c0_i32_0 : i32, i32
  }
  func.func @transform_13(%arg0: i32, %arg1: i32) -> (i32, i32) {
    %c0_i32 = arith.constant 0 : i32
    %c0_i32_0 = arith.constant 0 : i32
    %c0_i32_1 = arith.constant 0 : i32
    return %c0_i32, %c0_i32_0 : i32, i32
  }
  func.func @transform_14(%arg0: i32, %arg1: i32) -> (i32, i32) {
    %c0_i32 = arith.constant 0 : i32
    %c0_i32_0 = arith.constant 0 : i32
    %c0_i32_1 = arith.constant 0 : i32
    return %c0_i32, %c0_i32_0 : i32, i32
  }
  func.func @transform_15(%arg0: i32, %arg1: i32) -> (i32, i32) {
    %c0_i32 = arith.constant 0 : i32
    %c0_i32_0 = arith.constant 0 : i32
    %c0_i32_1 = arith.constant 0 : i32
    return %c0_i32, %c0_i32_0 : i32, i32
  }
  func.func @transform_16(%arg0: i32, %arg1: i32) -> (i32, i32, i32) {
    %c0_i32 = arith.constant 0 : i32
    %c0_i32_0 = arith.constant 0 : i32
    return %arg0, %arg1, %c0_i32 : i32, i32, i32
  }
}

</mosaic_0001>

<llo_original>
// kernel: tpu_custom_call.1
$region0: #{tpu_custom_call.1}
  #allocation0 [shape = 'u32[]', space=smem, size = 0x4, offset = 0x4, fixed_abs, tag = 'smem constant byte address 0x4 - core index']
  #allocation1 [shape = 'u32[72,128]{1,0:T(1,128)}', space=vmem, size = 0x9000, scoped, tag = 'internal scratch']
  #allocation2 [shape = 'f32[8,32]{1,0:T(8,128)}', space=vmem, size = 0x1000, scoped, tag = 'scratch operand']
  %s0 = inlined_call_operand.vmem [shape: f32[2,24,32], index: 0, kind: input, shape index: {}]
  %s1 = inlined_call_operand.vmem [shape: f32[2,24,32], index: 1, kind: input, shape index: {}]
  %s2 = inlined_call_operand.vmem [shape: f32[2,24,32], index: 2, kind: input, shape index: {}]
  %s3 = inlined_call_operand.vmem [shape: f32[24,16], index: 3, kind: input, shape index: {}]
  %s4 = inlined_call_operand.vmem [shape: f32[24,16], index: 4, kind: input, shape index: {}]
  %s5 = inlined_call_operand.vmem [shape: f32[24,16], index: 5, kind: input, shape index: {}]
  %s6 = inlined_call_operand.vmem [shape: f32[24,16], index: 6, kind: input, shape index: {}]
  %s7 = inlined_call_operand.hbm [shape: f32[32,32], index: 7, kind: input, shape index: {}]
  %s8 = inlined_call_operand.vmem [shape: f32[32,16], index: 8, kind: input, shape index: {}]
  %s9 = inlined_call_operand.vmem [shape: f32[32,16], index: 9, kind: input, shape index: {}]
  %s10 = inlined_call_operand.vmem [shape: f32[1,32], index: 10, kind: input, shape index: {}]
  %s11 = inlined_call_operand.vmem [shape: f32[1,32], index: 11, kind: input, shape index: {}]
  %s12 = inlined_call_operand.vmem [shape: f32[32,32], index: 12, kind: input, shape index: {}]
  %s13 = inlined_call_operand.vmem [shape: f32[1,32], index: 13, kind: input, shape index: {}]
  %s14 = inlined_call_operand.vmem [shape: f32[1,32], index: 14, kind: input, shape index: {}]
  %s15 = inlined_call_operand.vmem [shape: f32[1,32], index: 15, kind: input, shape index: {}]
  %s16 = inlined_call_operand.hbm [shape: f32[2,24,32], index: 16, kind: output, shape index: {}]
  %s17 = sld [smem:[#allocation0]]
  $region101: #{tpu_custom_call.1} parent=0
    _
  %s19 = ssub.s32 1, %s17
  %s20 = scalar_select 0, %s19, %s17
  $region1: #{tpu_custom_call.1} parent=0
    #allocation3 [shape = 'u8[16384]{0}', space=vmem, size = 0x4000, scoped, tag = 'input window, operand 7, single buffered']
    #allocation4 [shape = 's32[2]{0}', space=sflag, size = 0x8, scoped, tag = 'scoped memory for tpu_custom_call.1']
    #allocation5 [shape = 's32[2]{0}', space=sflag, size = 0x8, scoped, tag = 'scoped memory for tpu_custom_call.1']
    #allocation6 [shape = 'u8[8192]{0}', space=vmem, size = 0x2000, scoped, tag = 'output window, operand 0']
    %21 = vsyncpa [#allocation4], 0
    %22 = vsyncpa [#allocation5], 0
    %s23 = scalar_lea.sflag [#allocation5], 1
    %24 = vsyncpa %s23, 0
    loop: start=0, step=1, limit=8
    $region2: #{tpu_custom_call.1} parent=1 // loop_pre_header
      _
    $region3: #{tpu_custom_call.1} parent=1 // loop_header
      %s26 = sphi 0, %s30
      %p27 = scmp.ge.s32.totalorder %s26, 8
      %s33 = sphi 0, %s45
      %s34 = sphi 0, %s41
      %s35 = sphi 0, %s33
      %s36 = sphi 0, %s34
      %s37 = sphi 0, %s35
      %s38 = sphi 0, %s36
      %s50 = sphi 0, %s52
      %s53 = sphi 0, %s50
      %s54 = sphi 0, %s53
      %s70 = sphi 0, %s54
      %s76 = sphi 0, %s78
      %s79 = sphi 0, %s76
      %s80 = sphi 0, %s79
      %s96 = sphi 0, %s80
      %s102 = sphi 0, %s104
      %s105 = sphi 0, %s102
      %s106 = sphi 0, %s105
      %s122 = sphi 0, %s106
      %s128 = sphi 0, %s130
      %s131 = sphi 0, %s128
      %s132 = sphi 0, %s131
      %s148 = sphi 0, %s132
      %s154 = sphi 0, %s156
      %s157 = sphi 0, %s154
      %s158 = sphi 0, %s157
      %s174 = sphi 0, %s158
      %s178 = sphi 0, %s178
      %s180 = sphi 0, %s178
      %s181 = sphi 0, %s180
      %s195 = sphi 0, %s181
      %s199 = sphi 0, %s199
      %s201 = sphi 0, %s199
      %s202 = sphi 0, %s201
      %s216 = sphi 0, %s202
      %s220 = sphi 0, %s220
      %s222 = sphi 0, %s220
      %s223 = sphi 0, %s222
      %s237 = sphi 0, %s223
      %s241 = sphi 0, %s241
      %s243 = sphi 0, %s241
      %s244 = sphi 0, %s243
      %s258 = sphi 0, %s244
      %s262 = sphi 0, %s262
      %s264 = sphi 0, %s262
      %s265 = sphi 0, %s264
      %s279 = sphi 0, %s265
      %s283 = sphi 0, %s283
      %s285 = sphi 0, %s283
      %s286 = sphi 0, %s285
      %s300 = sphi 0, %s286
      %s304 = sphi 0, %s304
      %s306 = sphi 0, %s304
      %s307 = sphi 0, %s306
      %s321 = sphi 0, %s307
      %s325 = sphi 0, %s325
      %s327 = sphi 0, %s325
      %s328 = sphi 0, %s327
      %s342 = sphi 0, %s328
      %s346 = sphi 0, %s346
      %s348 = sphi 0, %s346
      %s349 = sphi 0, %s348
      %s363 = sphi 0, %s349
      %s367 = sphi 0, %s367
      %s369 = sphi 0, %s367
      %s370 = sphi 0, %s369
      %s384 = sphi 0, %s370
      %s388 = sphi 0, %s388
      %s390 = sphi 0, %s388
      %s391 = sphi 0, %s390
      %s405 = sphi 0, %s391
      %s413 = sphi 0, %s415
      %s416 = sphi 0, %s413
      %s417 = sphi 0, %s416
      %s433 = sphi 0, %s417
    $region4: #{tpu_custom_call.1} parent=1 // loop_header_branch
      %29 = sbr.rel (%p27) target = $region8
    $region5: #{tpu_custom_call.1} parent=1 // loop_body
      %s31 = ssub.s32 %s26, 1
      %s32 = ssub.s32 %s26, 2
      %s39 = sadd.s32 1, %s34
      %p40 = scmp.ge.s32.totalorder %s39, 3
      %s41 = scalar_select %p40, 0, %s39
      %s42 = sadd.s32 1, %s33
      %s43 = scalar_select %p40, %s42, %s33
      %p44 = scmp.ge.s32.totalorder %s43, 2
      %s45 = scalar_select %p44, 0, %s43
      %s46 = ssub.s32 %s33, %s45
      %s47 = ssub.s32 %s34, %s41
      %s48 = sor.u32 %s46, %s47
      %p49 = scmp.eq.s32.totalorder %s48, 0
      %s51 = sadd.s32 %s50, 1
      %s52 = scalar_select %p49, %s50, %s51
      %p55 = pneg %p49
      %p56 = scmp.eq.s32.totalorder %s26, 5
      %p57 = por %p55, %p56
      %p58 = scmp.ne.s32.totalorder %s50, %s53
      %p59 = scmp.eq.s32.totalorder %s26, 0
      %p60 = por %p58, %p59
      %p61 = scmp.ne.s32.totalorder %s50, %s53
      %p62 = scmp.eq.s32.totalorder %s31, 5
      %p63 = por %p61, %p62
      %p64 = scmp.ne.s32.totalorder %s53, %s54
      %p65 = scmp.eq.s32.totalorder %s31, 0
      %p66 = por %p64, %p65
      %p67 = scmp.ne.s32.totalorder %s53, %s54
      %p68 = scmp.eq.s32.totalorder %s32, 5
      %p69 = por %p67, %p68
      %p71 = scmp.ne.s32.totalorder %s54, %s70
      %p72 = scmp.eq.s32.totalorder %s32, 0
      %p73 = por %p71, %p72
      %s74 = ssub.s32 %s33, %s45
      %p75 = scmp.eq.s32.totalorder %s74, 0
      %s77 = sadd.s32 %s76, 1
      %s78 = scalar_select %p75, %s76, %s77
      %p81 = pneg %p75
      %p82 = scmp.eq.s32.totalorder %s26, 5
      %p83 = por %p81, %p82
      %p84 = scmp.ne.s32.totalorder %s76, %s79
      %p85 = scmp.eq.s32.totalorder %s26, 0
      %p86 = por %p84, %p85
      %p87 = scmp.ne.s32.totalorder %s76, %s79
      %p88 = scmp.eq.s32.totalorder %s31, 5
      %p89 = por %p87, %p88
      %p90 = scmp.ne.s32.totalorder %s79, %s80
      %p91 = scmp.eq.s32.totalorder %s31, 0
      %p92 = por %p90, %p91
      %p93 = scmp.ne.s32.totalorder %s79, %s80
      %p94 = scmp.eq.s32.totalorder %s32, 5
      %p95 = por %p93, %p94
      %p97 = scmp.ne.s32.totalorder %s80, %s96
      %p98 = scmp.eq.s32.totalorder %s32, 0
      %p99 = por %p97, %p98
      %s100 = ssub.s32 %s33, %s45
      %p101 = scmp.eq.s32.totalorder %s100, 0
      %s103 = sadd.s32 %s102, 1
      %s104 = scalar_select %p101, %s102, %s103
      %p107 = pneg %p101
      %p108 = scmp.eq.s32.totalorder %s26, 5
      %p109 = por %p107, %p108
      %p110 = scmp.ne.s32.totalorder %s102, %s105
      %p111 = scmp.eq.s32.totalorder %s26, 0
      %p112 = por %p110, %p111
      %p113 = scmp.ne.s32.totalorder %s102, %s105
      %p114 = scmp.eq.s32.totalorder %s31, 5
      %p115 = por %p113, %p114
      %p116 = scmp.ne.s32.totalorder %s105, %s106
      %p117 = scmp.eq.s32.totalorder %s31, 0
      %p118 = por %p116, %p117
      %p119 = scmp.ne.s32.totalorder %s105, %s106
      %p120 = scmp.eq.s32.totalorder %s32, 5
      %p121 = por %p119, %p120
      %p123 = scmp.ne.s32.totalorder %s106, %s122
      %p124 = scmp.eq.s32.totalorder %s32, 0
      %p125 = por %p123, %p124
      %s126 = ssub.s32 %s34, %s41
      %p127 = scmp.eq.s32.totalorder %s126, 0
      %s129 = sadd.s32 %s128, 1
      %s130 = scalar_select %p127, %s128, %s129
      %p133 = pneg %p127
      %p134 = scmp.eq.s32.totalorder %s26, 5
      %p135 = por %p133, %p134
      %p136 = scmp.ne.s32.totalorder %s128, %s131
      %p137 = scmp.eq.s32.totalorder %s26, 0
      %p138 = por %p136, %p137
      %p139 = scmp.ne.s32.totalorder %s128, %s131
      %p140 = scmp.eq.s32.totalorder %s31, 5
      %p141 = por %p139, %p140
      %p142 = scmp.ne.s32.totalorder %s131, %s132
      %p143 = scmp.eq.s32.totalorder %s31, 0
      %p144 = por %p142, %p143
      %p145 = scmp.ne.s32.totalorder %s131, %s132
      %p146 = scmp.eq.s32.totalorder %s32, 5
      %p147 = por %p145, %p146
      %p149 = scmp.ne.s32.totalorder %s132, %s148
      %p150 = scmp.eq.s32.totalorder %s32, 0
      %p151 = por %p149, %p150
      %s152 = ssub.s32 %s34, %s41
      %p153 = scmp.eq.s32.totalorder %s152, 0
      %s155 = sadd.s32 %s154, 1
      %s156 = scalar_select %p153, %s154, %s155
      %p159 = pneg %p153
      %p160 = scmp.eq.s32.totalorder %s26, 5
      %p161 = por %p159, %p160
      %p162 = scmp.ne.s32.totalorder %s154, %s157
      %p163 = scmp.eq.s32.totalorder %s26, 0
      %p164 = por %p162, %p163
      %p165 = scmp.ne.s32.totalorder %s154, %s157
      %p166 = scmp.eq.s32.totalorder %s31, 5
      %p167 = por %p165, %p166
      %p168 = scmp.ne.s32.totalorder %s157, %s158
      %p169 = scmp.eq.s32.totalorder %s31, 0
      %p170 = por %p168, %p169
      %p171 = scmp.ne.s32.totalorder %s157, %s158
      %p172 = scmp.eq.s32.totalorder %s32, 5
      %p173 = por %p171, %p172
      %p175 = scmp.ne.s32.totalorder %s158, %s174
      %p176 = scmp.eq.s32.totalorder %s32, 0
      %p177 = por %p175, %p176
      %s179 = sadd.s32 %s178, 1
      %p182 = scmp.eq.s32.totalorder %s26, 5
      %p183 = scmp.ne.s32.totalorder %s178, %s180
      %p184 = scmp.eq.s32.totalorder %s26, 0
      %p185 = por %p183, %p184
      %p186 = scmp.ne.s32.totalorder %s178, %s180
      %p187 = scmp.eq.s32.totalorder %s31, 5
      %p188 = por %p186, %p187
      %p189 = scmp.ne.s32.totalorder %s180, %s181
      %p190 = scmp.eq.s32.totalorder %s31, 0
      %p191 = por %p189, %p190
      %p192 = scmp.ne.s32.totalorder %s180, %s181
      %p193 = scmp.eq.s32.totalorder %s32, 5
      %p194 = por %p192, %p193
      %p196 = scmp.ne.s32.totalorder %s181, %s195
      %p197 = scmp.eq.s32.totalorder %s32, 0
      %p198 = por %p196, %p197
      %s200 = sadd.s32 %s199, 1
      %p203 = scmp.eq.s32.totalorder %s26, 5
      %p204 = scmp.ne.s32.totalorder %s199, %s201
      %p205 = scmp.eq.s32.totalorder %s26, 0
      %p206 = por %p204, %p205
      %p207 = scmp.ne.s32.totalorder %s199, %s201
      %p208 = scmp.eq.s32.totalorder %s31, 5
      %p209 = por %p207, %p208
      %p210 = scmp.ne.s32.totalorder %s201, %s202
      %p211 = scmp.eq.s32.totalorder %s31, 0
      %p212 = por %p210, %p211
      %p213 = scmp.ne.s32.totalorder %s201, %s202
      %p214 = scmp.eq.s32.totalorder %s32, 5
      %p215 = por %p213, %p214
      %p217 = scmp.ne.s32.totalorder %s202, %s216
      %p218 = scmp.eq.s32.totalorder %s32, 0
      %p219 = por %p217, %p218
      %s221 = sadd.s32 %s220, 1
      %p224 = scmp.eq.s32.totalorder %s26, 5
      %p225 = scmp.ne.s32.totalorder %s220, %s222
      %p226 = scmp.eq.s32.totalorder %s26, 0
      %p227 = por %p225, %p226
      %p228 = scmp.ne.s32.totalorder %s220, %s222
      %p229 = scmp.eq.s32.totalorder %s31, 5
      %p230 = por %p228, %p229
      %p231 = scmp.ne.s32.totalorder %s222, %s223
      %p232 = scmp.eq.s32.totalorder %s31, 0
      %p233 = por %p231, %p232
      %p234 = scmp.ne.s32.totalorder %s222, %s223
      %p235 = scmp.eq.s32.totalorder %s32, 5
      %p236 = por %p234, %p235
      %p238 = scmp.ne.s32.totalorder %s223, %s237
      %p239 = scmp.eq.s32.totalorder %s32, 0
      %p240 = por %p238, %p239
      %s242 = sadd.s32 %s241, 1
      %p245 = scmp.eq.s32.totalorder %s26, 5
      %p246 = scmp.ne.s32.totalorder %s241, %s243
      %p247 = scmp.eq.s32.totalorder %s26, 0
      %p248 = por %p246, %p247
      %p249 = scmp.ne.s32.totalorder %s241, %s243
      %p250 = scmp.eq.s32.totalorder %s31, 5
      %p251 = por %p249, %p250
      %p252 = scmp.ne.s32.totalorder %s243, %s244
      %p253 = scmp.eq.s32.totalorder %s31, 0
      %p254 = por %p252, %p253
      %p255 = scmp.ne.s32.totalorder %s243, %s244
      %p256 = scmp.eq.s32.totalorder %s32, 5
      %p257 = por %p255, %p256
      %p259 = scmp.ne.s32.totalorder %s244, %s258
      %p260 = scmp.eq.s32.totalorder %s32, 0
      %p261 = por %p259, %p260
      %s263 = sadd.s32 %s262, 1
      %p266 = scmp.eq.s32.totalorder %s26, 5
      %p267 = scmp.ne.s32.totalorder %s262, %s264
      %p268 = scmp.eq.s32.totalorder %s26, 0
      %p269 = por %p267, %p268
      %p270 = scmp.ne.s32.totalorder %s262, %s264
      %p271 = scmp.eq.s32.totalorder %s31, 5
      %p272 = por %p270, %p271
      %p273 = scmp.ne.s32.totalorder %s264, %s265
      %p274 = scmp.eq.s32.totalorder %s31, 0
      %p275 = por %p273, %p274
      %p276 = scmp.ne.s32.totalorder %s264, %s265
      %p277 = scmp.eq.s32.totalorder %s32, 5
      %p278 = por %p276, %p277
      %p280 = scmp.ne.s32.totalorder %s265, %s279
      %p281 = scmp.eq.s32.totalorder %s32, 0
      %p282 = por %p280, %p281
      %s284 = sadd.s32 %s283, 1
      %p287 = scmp.eq.s32.totalorder %s26, 5
      %p288 = scmp.ne.s32.totalorder %s283, %s285
      %p289 = scmp.eq.s32.totalorder %s26, 0
      %p290 = por %p288, %p289
      %p291 = scmp.ne.s32.totalorder %s283, %s285
      %p292 = scmp.eq.s32.totalorder %s31, 5
      %p293 = por %p291, %p292
      %p294 = scmp.ne.s32.totalorder %s285, %s286
      %p295 = scmp.eq.s32.totalorder %s31, 0
      %p296 = por %p294, %p295
      %p297 = scmp.ne.s32.totalorder %s285, %s286
      %p298 = scmp.eq.s32.totalorder %s32, 5
      %p299 = por %p297, %p298
      %p301 = scmp.ne.s32.totalorder %s286, %s300
      %p302 = scmp.eq.s32.totalorder %s32, 0
      %p303 = por %p301, %p302
      %s305 = sadd.s32 %s304, 1
      %p308 = scmp.eq.s32.totalorder %s26, 5
      %p309 = scmp.ne.s32.totalorder %s304, %s306
      %p310 = scmp.eq.s32.totalorder %s26, 0
      %p311 = por %p309, %p310
      %p312 = scmp.ne.s32.totalorder %s304, %s306
      %p313 = scmp.eq.s32.totalorder %s31, 5
      %p314 = por %p312, %p313
      %p315 = scmp.ne.s32.totalorder %s306, %s307
      %p316 = scmp.eq.s32.totalorder %s31, 0
      %p317 = por %p315, %p316
      %p318 = scmp.ne.s32.totalorder %s306, %s307
      %p319 = scmp.eq.s32.totalorder %s32, 5
      %p320 = por %p318, %p319
      %p322 = scmp.ne.s32.totalorder %s307, %s321
      %p323 = scmp.eq.s32.totalorder %s32, 0
      %p324 = por %p322, %p323
      %s326 = sadd.s32 %s325, 1
      %p329 = scmp.eq.s32.totalorder %s26, 5
      %p330 = scmp.ne.s32.totalorder %s325, %s327
      %p331 = scmp.eq.s32.totalorder %s26, 0
      %p332 = por %p330, %p331
      %p333 = scmp.ne.s32.totalorder %s325, %s327
      %p334 = scmp.eq.s32.totalorder %s31, 5
      %p335 = por %p333, %p334
      %p336 = scmp.ne.s32.totalorder %s327, %s328
      %p337 = scmp.eq.s32.totalorder %s31, 0
      %p338 = por %p336, %p337
      %p339 = scmp.ne.s32.totalorder %s327, %s328
      %p340 = scmp.eq.s32.totalorder %s32, 5
      %p341 = por %p339, %p340
      %p343 = scmp.ne.s32.totalorder %s328, %s342
      %p344 = scmp.eq.s32.totalorder %s32, 0
      %p345 = por %p343, %p344
      %s347 = sadd.s32 %s346, 1
      %p350 = scmp.eq.s32.totalorder %s26, 5
      %p351 = scmp.ne.s32.totalorder %s346, %s348
      %p352 = scmp.eq.s32.totalorder %s26, 0
      %p353 = por %p351, %p352
      %p354 = scmp.ne.s32.totalorder %s346, %s348
      %p355 = scmp.eq.s32.totalorder %s31, 5
      %p356 = por %p354, %p355
      %p357 = scmp.ne.s32.totalorder %s348, %s349
      %p358 = scmp.eq.s32.totalorder %s31, 0
      %p359 = por %p357, %p358
      %p360 = scmp.ne.s32.totalorder %s348, %s349
      %p361 = scmp.eq.s32.totalorder %s32, 5
      %p362 = por %p360, %p361
      %p364 = scmp.ne.s32.totalorder %s349, %s363
      %p365 = scmp.eq.s32.totalorder %s32, 0
      %p366 = por %p364, %p365
      %s368 = sadd.s32 %s367, 1
      %p371 = scmp.eq.s32.totalorder %s26, 5
      %p372 = scmp.ne.s32.totalorder %s367, %s369
      %p373 = scmp.eq.s32.totalorder %s26, 0
      %p374 = por %p372, %p373
      %p375 = scmp.ne.s32.totalorder %s367, %s369
      %p376 = scmp.eq.s32.totalorder %s31, 5
      %p377 = por %p375, %p376
      %p378 = scmp.ne.s32.totalorder %s369, %s370
      %p379 = scmp.eq.s32.totalorder %s31, 0
      %p380 = por %p378, %p379
      %p381 = scmp.ne.s32.totalorder %s369, %s370
      %p382 = scmp.eq.s32.totalorder %s32, 5
      %p383 = por %p381, %p382
      %p385 = scmp.ne.s32.totalorder %s370, %s384
      %p386 = scmp.eq.s32.totalorder %s32, 0
      %p387 = por %p385, %p386
      %s389 = sadd.s32 %s388, 1
      %p392 = scmp.eq.s32.totalorder %s26, 5
      %p393 = scmp.ne.s32.totalorder %s388, %s390
      %p394 = scmp.eq.s32.totalorder %s26, 0
      %p395 = por %p393, %p394
      %p396 = scmp.ne.s32.totalorder %s388, %s390
      %p397 = scmp.eq.s32.totalorder %s31, 5
      %p398 = por %p396, %p397
      %p399 = scmp.ne.s32.totalorder %s390, %s391
      %p400 = scmp.eq.s32.totalorder %s31, 0
      %p401 = por %p399, %p400
      %p402 = scmp.ne.s32.totalorder %s390, %s391
      %p403 = scmp.eq.s32.totalorder %s32, 5
      %p404 = por %p402, %p403
      %p406 = scmp.ne.s32.totalorder %s391, %s405
      %p407 = scmp.eq.s32.totalorder %s32, 0
      %p408 = por %p406, %p407
      %s409 = ssub.s32 %s33, %s45
      %s410 = ssub.s32 %s34, %s41
      %s411 = sor.u32 %s409, %s410
      %p412 = scmp.eq.s32.totalorder %s411, 0
      %s414 = sadd.s32 %s413, 1
      %s415 = scalar_select %p412, %s413, %s414
      %p418 = pneg %p412
      %p419 = scmp.eq.s32.totalorder %s26, 5
      %p420 = por %p418, %p419
      %p421 = scmp.ne.s32.totalorder %s413, %s416
      %p422 = scmp.eq.s32.totalorder %s26, 0
      %p423 = por %p421, %p422
      %p424 = scmp.ne.s32.totalorder %s413, %s416
      %p425 = scmp.eq.s32.totalorder %s31, 5
      %p426 = por %p424, %p425
      %p427 = scmp.ne.s32.totalorder %s416, %s417
      %p428 = scmp.eq.s32.totalorder %s31, 0
      %p429 = por %p427, %p428
      %p430 = scmp.ne.s32.totalorder %s416, %s417
      %p431 = scmp.eq.s32.totalorder %s32, 5
      %p432 = por %p430, %p431
      %p434 = scmp.ne.s32.totalorder %s417, %s433
      %p435 = scmp.eq.s32.totalorder %s32, 0
      %p436 = por %p434, %p435
      %p437 = scmp.le.s32.totalorder 1, %s26
      %p438 = scmp.lt.s32.totalorder %s26, 7
      %p439 = pnand %p437, %p438
      %p440 = pneg %p439
      // Predicated region
      $region9: #{tpu_custom_call.1} parent=5 // pred_check
        _
      $region10: #{tpu_custom_call.1} parent=5 // pred_check_branch
        %442 = sbr.rel (%p439) target = $region12
      $region11: #{tpu_custom_call.1} parent=5 // pred_region
        %s443 = ssub.s32 %s26, 1
        // Predicated region
        $region13: #{tpu_custom_call.1} parent=11 // pred_check
          %p444 = pneg %p191
        $region14: #{tpu_custom_call.1} parent=11 // pred_check_branch
          %446 = sbr.rel (%p444) target = $region16
        $region15: #{tpu_custom_call.1} parent=11 // pred_region
          _
        $region16: #{tpu_custom_call.1} parent=11 // pred_fallthru
          _
        // Predicated region
        $region17: #{tpu_custom_call.1} parent=11 // pred_check
          %p447 = pneg %p212
        $region18: #{tpu_custom_call.1} parent=11 // pred_check_branch
          %449 = sbr.rel (%p447) target = $region20
        $region19: #{tpu_custom_call.1} parent=11 // pred_region
          _
        $region20: #{tpu_custom_call.1} parent=11 // pred_fallthru
          _
        // Predicated region
        $region21: #{tpu_custom_call.1} parent=11 // pred_check
          %p450 = pneg %p233
        $region22: #{tpu_custom_call.1} parent=11 // pred_check_branch
          %452 = sbr.rel (%p450) target = $region24
        $region23: #{tpu_custom_call.1} parent=11 // pred_region
          %454 = vsyncadd [#allocation4], 0
          %s455 = sshll.u32 %s7, 4
          %s456 = int_to_ptr.hbm [resolvable:$true] %s455
          %s457 = sshll.u32 [#allocation3], 4
          %s458 = int_to_ptr.vmem [resolvable:$true] %s457
          %463 = dma.hbm_to_vmem [thread:$0]  %s456, 512, %s458, [#allocation4], 128, 128, 8
        $region24: #{tpu_custom_call.1} parent=11 // pred_fallthru
          _
        // Predicated region
        $region25: #{tpu_custom_call.1} parent=11 // pred_check
          %p464 = pneg %p254
        $region26: #{tpu_custom_call.1} parent=11 // pred_check_branch
          %466 = sbr.rel (%p464) target = $region28
        $region27: #{tpu_custom_call.1} parent=11 // pred_region
          _
        $region28: #{tpu_custom_call.1} parent=11 // pred_fallthru
          _
        // Predicated region
        $region29: #{tpu_custom_call.1} parent=11 // pred_check
          %p467 = pneg %p275
        $region30: #{tpu_custom_call.1} parent=11 // pred_check_branch
          %469 = sbr.rel (%p467) target = $region32
        $region31: #{tpu_custom_call.1} parent=11 // pred_region
          _
        $region32: #{tpu_custom_call.1} parent=11 // pred_fallthru
          _
        // Predicated region
        $region33: #{tpu_custom_call.1} parent=11 // pred_check
          %p470 = pneg %p296
        $region34: #{tpu_custom_call.1} parent=11 // pred_check_branch
          %472 = sbr.rel (%p470) target = $region36
        $region35: #{tpu_custom_call.1} parent=11 // pred_region
          _
        $region36: #{tpu_custom_call.1} parent=11 // pred_fallthru
          _
        // Predicated region
        $region37: #{tpu_custom_call.1} parent=11 // pred_check
          %p473 = pneg %p317
        $region38: #{tpu_custom_call.1} parent=11 // pred_check_branch
          %475 = sbr.rel (%p473) target = $region40
        $region39: #{tpu_custom_call.1} parent=11 // pred_region
          _
        $region40: #{tpu_custom_call.1} parent=11 // pred_fallthru
          _
        // Predicated region
        $region41: #{tpu_custom_call.1} parent=11 // pred_check
          %p476 = pneg %p338
        $region42: #{tpu_custom_call.1} parent=11 // pred_check_branch
          %478 = sbr.rel (%p476) target = $region44
        $region43: #{tpu_custom_call.1} parent=11 // pred_region
          _
        $region44: #{tpu_custom_call.1} parent=11 // pred_fallthru
          _
        // Predicated region
        $region45: #{tpu_custom_call.1} parent=11 // pred_check
          %p479 = pneg %p359
        $region46: #{tpu_custom_call.1} parent=11 // pred_check_branch
          %481 = sbr.rel (%p479) target = $region48
        $region47: #{tpu_custom_call.1} parent=11 // pred_region
          _
        $region48: #{tpu_custom_call.1} parent=11 // pred_fallthru
          _
        // Predicated region
        $region49: #{tpu_custom_call.1} parent=11 // pred_check
          %p482 = pneg %p380
        $region50: #{tpu_custom_call.1} parent=11 // pred_check_branch
          %484 = sbr.rel (%p482) target = $region52
        $region51: #{tpu_custom_call.1} parent=11 // pred_region
          _
        $region52: #{tpu_custom_call.1} parent=11 // pred_fallthru
          _
        // Predicated region
        $region53: #{tpu_custom_call.1} parent=11 // pred_check
          %p485 = pneg %p401
        $region54: #{tpu_custom_call.1} parent=11 // pred_check_branch
          %487 = sbr.rel (%p485) target = $region56
        $region55: #{tpu_custom_call.1} parent=11 // pred_region
          _
        $region56: #{tpu_custom_call.1} parent=11 // pred_fallthru
          _
      $region12: #{tpu_custom_call.1} parent=5 // pred_fallthru
        _
      %p488 = scmp.lt.s32.totalorder %s26, 6
      // Predicated region
      $region57: #{tpu_custom_call.1} parent=5 // pred_check
        %p489 = pneg %p488
      $region58: #{tpu_custom_call.1} parent=5 // pred_check_branch
        %491 = sbr.rel (%p489) target = $region60
      $region59: #{tpu_custom_call.1} parent=5 // pred_region
        // Predicated region
        $region61: #{tpu_custom_call.1} parent=59 // pred_check
          %p492 = pneg %p60
        $region62: #{tpu_custom_call.1} parent=59 // pred_check_branch
          %494 = sbr.rel (%p492) target = $region64
        $region63: #{tpu_custom_call.1} parent=59 // pred_region
          %p495 = scmp.lt.s32.totalorder %s33, 1
          %s496 = scalar_select %p495, %s33, 1
          %p497 = scmp.lt.s32.totalorder %s34, 2
          %s498 = scalar_select %p497, %s34, 2
          %s499 = smul.addr %s496, 3
          %s500 = sadd.s32 %s498, %s499
          %s501 = smul.addr %s500, 8
          %s502 = scalar_lea.vmem %s0, %s501
        $region64: #{tpu_custom_call.1} parent=59 // pred_fallthru
          _
        // Predicated region
        $region65: #{tpu_custom_call.1} parent=59 // pred_check
          %p503 = pneg %p86
        $region66: #{tpu_custom_call.1} parent=59 // pred_check_branch
          %505 = sbr.rel (%p503) target = $region68
        $region67: #{tpu_custom_call.1} parent=59 // pred_region
          %p506 = scmp.lt.s32.totalorder %s33, 1
          %s507 = scalar_select %p506, %s33, 1
          %s508 = smul.addr %s507, 3
          %s509 = smul.addr %s508, 8
          %s510 = scalar_lea.vmem %s1, %s509
        $region68: #{tpu_custom_call.1} parent=59 // pred_fallthru
          _
        // Predicated region
        $region69: #{tpu_custom_call.1} parent=59 // pred_check
          %p511 = pneg %p112
        $region70: #{tpu_custom_call.1} parent=59 // pred_check_branch
          %513 = sbr.rel (%p511) target = $region72
        $region71: #{tpu_custom_call.1} parent=59 // pred_region
          %p514 = scmp.lt.s32.totalorder %s33, 1
          %s515 = scalar_select %p514, %s33, 1
          %s516 = smul.addr %s515, 3
          %s517 = smul.addr %s516, 8
          %s518 = scalar_lea.vmem %s2, %s517
        $region72: #{tpu_custom_call.1} parent=59 // pred_fallthru
          _
        // Predicated region
        $region73: #{tpu_custom_call.1} parent=59 // pred_check
          %p519 = pneg %p138
        $region74: #{tpu_custom_call.1} parent=59 // pred_check_branch
          %521 = sbr.rel (%p519) target = $region76
        $region75: #{tpu_custom_call.1} parent=59 // pred_region
          %p522 = scmp.lt.s32.totalorder %s34, 2
          %s523 = scalar_select %p522, %s34, 2
          %s524 = smul.addr %s523, 8
          %s525 = scalar_lea.vmem %s3, %s524
        $region76: #{tpu_custom_call.1} parent=59 // pred_fallthru
          _
        // Predicated region
        $region77: #{tpu_custom_call.1} parent=59 // pred_check
          %p526 = pneg %p164
        $region78: #{tpu_custom_call.1} parent=59 // pred_check_branch
          %528 = sbr.rel (%p526) target = $region80
        $region79: #{tpu_custom_call.1} parent=59 // pred_region
          %p529 = scmp.lt.s32.totalorder %s34, 2
          %s530 = scalar_select %p529, %s34, 2
          %s531 = smul.addr %s530, 8
          %s532 = scalar_lea.vmem %s4, %s531
        $region80: #{tpu_custom_call.1} parent=59 // pred_fallthru
          _
      $region60: #{tpu_custom_call.1} parent=5 // pred_fallthru
        _
      %p533 = scmp.le.s32.totalorder 1, %s26
      %p534 = scmp.lt.s32.totalorder %s26, 7
      %p535 = pnand %p533, %p534
      %p536 = pneg %p535
      // Predicated region
      $region81: #{tpu_custom_call.1} parent=5 // pred_check
        _
      $region82: #{tpu_custom_call.1} parent=5 // pred_check_branch
        %538 = sbr.rel (%p535) target = $region84
      $region83: #{tpu_custom_call.1} parent=5 // pred_region
        %s539 = ssub.s32 %s26, 1
        // Predicated region
        $region85: #{tpu_custom_call.1} parent=83 // pred_check
          %p540 = pneg %p233
        $region86: #{tpu_custom_call.1} parent=83 // pred_check_branch
          %542 = sbr.rel (%p540) target = $region88
        $region87: #{tpu_custom_call.1} parent=83 // pred_region
          %544 = dma.done [#allocation4], 512
        $region88: #{tpu_custom_call.1} parent=83 // pred_fallthru
          _
        %p545 = scmp.lt.s32.totalorder %s35, 1
        %s546 = scalar_select %p545, %s35, 1
        %p547 = scmp.lt.s32.totalorder %s36, 2
        %s548 = scalar_select %p547, %s36, 2
        %s549 = smul.addr %s546, 3
        %s550 = sadd.s32 %s548, %s549
        %s551 = smul.addr %s550, 8
        %s552 = scalar_lea.vmem %s0, %s551
        %p553 = pneg %p66
        %p554 = pneg %p63
        %p555 = scmp.lt.s32.totalorder %s35, 1
        %s556 = scalar_select %p555, %s35, 1
        %s557 = smul.addr %s556, 3
        %s558 = smul.addr %s557, 8
        %s559 = scalar_lea.vmem %s1, %s558
        %p560 = pneg %p92
        %p561 = pneg %p89
        %p562 = scmp.lt.s32.totalorder %s35, 1
        %s563 = scalar_select %p562, %s35, 1
        %s564 = smul.addr %s563, 3
        %s565 = smul.addr %s564, 8
        %s566 = scalar_lea.vmem %s2, %s565
        %p567 = pneg %p118
        %p568 = pneg %p115
        %p569 = scmp.lt.s32.totalorder %s36, 2
        %s570 = scalar_select %p569, %s36, 2
        %s571 = smul.addr %s570, 8
        %s572 = scalar_lea.vmem %s3, %s571
        %p573 = pneg %p144
        %p574 = pneg %p141
        %p575 = scmp.lt.s32.totalorder %s36, 2
        %s576 = scalar_select %p575, %s36, 2
        %s577 = smul.addr %s576, 8
        %s578 = scalar_lea.vmem %s4, %s577
        %p579 = pneg %p170
        %p580 = pneg %p167
        %p581 = pneg %p191
        %p582 = pneg %p188
        %p583 = pneg %p212
        %p584 = pneg %p209
        %p585 = pneg %p233
        %p586 = pneg %p230
        %p587 = pneg %p254
        %p588 = pneg %p251
        %p589 = pneg %p275
        %p590 = pneg %p272
        %p591 = pneg %p296
        %p592 = pneg %p293
        %p593 = pneg %p317
        %p594 = pneg %p314
        %p595 = pneg %p338
        %p596 = pneg %p335
        %p597 = pneg %p359
        %p598 = pneg %p356
        %p599 = pneg %p380
        %p600 = pneg %p377
        %p601 = pneg %p401
        %p602 = pneg %p398
        %p603 = pneg %p429
        %p604 = pneg %p426
        %s605 = sand.u32 %s416, 1
        %s606 = scalar_lea.sflag [#allocation5], %s605
        %s607 = sand.u32 %s416, 1
        %s608 = smul.addr %s607, 8
        %s609 = scalar_lea.vmem [#allocation6], %s608
        %p610 = scmp.lt.s32.totalorder %s35, 1
        %s611 = scalar_select %p610, %s35, 1
        %p612 = scmp.lt.s32.totalorder %s36, 2
        %s613 = scalar_select %p612, %s36, 2
        %s614 = smul.addr %s611, 3
        %s615 = sadd.s32 %s613, %s614
        %s616 = smul.addr %s615, 8
        %s617 = scalar_lea.vmem %s0, %s616
        %p618 = scmp.lt.s32.totalorder %s35, 1
        %s619 = scalar_select %p618, %s35, 1
        %s620 = smul.addr %s619, 3
        %s621 = smul.addr %s620, 8
        %s622 = scalar_lea.vmem %s1, %s621
        %p623 = scmp.lt.s32.totalorder %s35, 1
        %s624 = scalar_select %p623, %s35, 1
        %s625 = smul.addr %s624, 3
        %s626 = smul.addr %s625, 8
        %s627 = scalar_lea.vmem %s2, %s626
        %p628 = scmp.lt.s32.totalorder %s36, 2
        %s629 = scalar_select %p628, %s36, 2
        %s630 = smul.addr %s629, 8
        %s631 = scalar_lea.vmem %s3, %s630
        %p632 = scmp.lt.s32.totalorder %s36, 2
        %s633 = scalar_select %p632, %s36, 2
        %s634 = smul.addr %s633, 8
        %s635 = scalar_lea.vmem %s4, %s634
        %v636 = vld [vmem:[%s617] sm:$0xff]
        %v637 = vld [vmem:[%s622] sm:$0xff]
        %v638 = vld [vmem:[%s622 + $0x8] sm:$0xff]
        %v639 = vld [vmem:[%s622 + $0x10] sm:$0xff]
        %v640 = vld [vmem:[%s627] sm:$0xff]
        %v641 = vld [vmem:[%s627 + $0x8] sm:$0xff]
        %v642 = vld [vmem:[%s627 + $0x10] sm:$0xff]
        %v643 = vld [vmem:[#allocation3] sm:$0xff]
        %v644 = vld [vmem:[#allocation3 + $0x8] sm:$0xff]
        %v645 = vld [vmem:[#allocation3 + $0x10] sm:$0xff]
        %v646 = vld [vmem:[#allocation3 + $0x18] sm:$0xff]
        %vm647 = vcmask 261120
        %v649 = vsel %vm647, %v636, 0
        %651 = vmatpush.msra.mxu0 0.0
        %652 = vmatpush.msra.mxu0 0.0
        %653 = vmatpush.msra.mxu0 0.0
        %654 = vmatpush.msra.mxu0 0.0
        %655 = vmatpush.msra.mxu0 0.0
        %656 = vmatpush.msra.mxu0 0.0
        %657 = vmatpush.msra.mxu0 0.0
        %658 = vmatpush.msra.mxu0 0.0
        %659 = vmatpush.msra.mxu0 0.0
        %660 = vmatpush.msra.mxu0 0.0
        %661 = vmatpush.msra.mxu0 0.0
        %662 = vmatpush.msra.mxu0 0.0
        %663 = vmatpush.msra.mxu0 %v646
        %664 = vmatpush.msra.mxu0 %v645
        %665 = vmatpush.msra.mxu0 %v644
        %666 = vmatpush.msra.mxu0 %v643
        %667 = vmatmul.f32.gmra.mxu0 %v649
        %v668 = vpop.f32.mrf.mxu0
        %v669 = vadd.f32 0.0, %v668
        %670 = vdwg.mxu0
        %v671 = vld [vmem:[%s10] sm:$0x1]
        %v673 = vperm.slane %v671, 0
        %v675 = vadd.f32 %v669, %v673
        %v676 = vld [vmem:[%s11] sm:$0x1]
        %v678 = vperm.slane %v676, 0
        %v680 = vadd.f32 %v669, %v678
        %v681 = vld [vmem:[%s631] sm:$0xff]
        %v682 = vld [vmem:[%s635] sm:$0xff]
        %v683 = vld [vmem:[%s5] sm:$0xff]
        %v684 = vld [vmem:[%s5 + $0x8] sm:$0xff]
        %v685 = vld [vmem:[%s5 + $0x10] sm:$0xff]
        %v686 = vld [vmem:[%s6] sm:$0xff]
        %v687 = vld [vmem:[%s6 + $0x8] sm:$0xff]
        %v688 = vld [vmem:[%s6 + $0x10] sm:$0xff]
        %v689 = vlaneseq
        %v690 = vshrl.u32 %v689, 7
        %s691 = smul.u32 %s36, 8
        %v692 = vstv %s691
        %v693 = vadd.s32 %v690, %v692
        %v694 = vlaneseq
        %v695 = vand.u32 %v694, 127
        %vm696 = vcmp.eq.s32.totalorder %v693, %v695
        %v697 = vsel %vm696, 2.0, 1.0
        %vm698 = vcmp.gt.s32.totalorder %v695, %v693
        %v699 = vsel %vm698, -1e+30, 0.0
        %v700 = vld [vmem:[%s8] sm:$0xff]
        %vm701 = vcmask 64512
        %v703 = vsel %vm701, %v680, 0
        %705 = vmatpush.msra.mxu0 0.0
        %706 = vmatpush.msra.mxu0 0.0
        %707 = vmatpush.msra.mxu0 0.0
        %708 = vmatpush.msra.mxu0 0.0
        %709 = vmatpush.msra.mxu0 0.0
        %710 = vmatpush.msra.mxu0 0.0
        %711 = vmatpush.msra.mxu0 0.0
        %712 = vmatpush.msra.mxu0 0.0
        %713 = vmatpush.msra.mxu0 0.0
        %714 = vmatpush.msra.mxu0 0.0
        %715 = vmatpush.msra.mxu0 0.0
        %716 = vmatpush.msra.mxu0 0.0
        %717 = vmatpush.msra.mxu0 0.0
        %718 = vmatpush.msra.mxu0 0.0
        %719 = vmatpush.msra.mxu0 0.0
        %720 = vmatpush.msra.mxu0 %v700
        %721 = vmatmul.f32.gmra.mxu0 %v703
        %v722 = vpop.f32.mrf.mxu0
        %v723 = vadd.f32 0.0, %v722
        %724 = vdwg.mxu0
        %v725 = vld [vmem:[%s9] sm:$0xff]
        %726 = vmatpush.msra.mxu0 0.0
        %727 = vmatpush.msra.mxu0 0.0
        %728 = vmatpush.msra.mxu0 0.0
        %729 = vmatpush.msra.mxu0 0.0
        %730 = vmatpush.msra.mxu0 0.0
        %731 = vmatpush.msra.mxu0 0.0
        %732 = vmatpush.msra.mxu0 0.0
        %733 = vmatpush.msra.mxu0 0.0
        %734 = vmatpush.msra.mxu0 0.0
        %735 = vmatpush.msra.mxu0 0.0
        %736 = vmatpush.msra.mxu0 0.0
        %737 = vmatpush.msra.mxu0 0.0
        %738 = vmatpush.msra.mxu0 0.0
        %739 = vmatpush.msra.mxu0 0.0
        %740 = vmatpush.msra.mxu0 0.0
        %741 = vmatpush.msra.mxu0 %v725
        %742 = vmatmul.f32.gmra.mxu0 %v703
        %v743 = vpop.f32.mrf.mxu0
        %v744 = vadd.f32 0.0, %v743
        %745 = vdwg.mxu0
        %v746 = vmul.f32 %v723, %v681
        %v747 = vmul.f32 %v744, %v682
        %v748 = vadd.f32 %v746, %v747
        %v749 = vmul.f32 %v744, %v681
        %v750 = vmul.f32 %v723, %v682
        %v751 = vsub.f32 %v749, %v750
        %vm752 = vcmask 130048
        %v754 = vsel %vm752, %v751, 0
        %v757 = vsel %vm752, %v686, 0
        %v760 = vsel %vm752, %v687, 0
        %v763 = vsel %vm752, %v688, 0
        %765 = vmatpush.xpose.msra.mxu0 0.0
        %766 = vmatpush.xpose.msra.mxu0 0.0
        %767 = vmatpush.xpose.msra.mxu0 0.0
        %768 = vmatpush.xpose.msra.mxu0 0.0
        %769 = vmatpush.xpose.msra.mxu0 0.0
        %770 = vmatpush.xpose.msra.mxu0 0.0
        %771 = vmatpush.xpose.msra.mxu0 0.0
        %772 = vmatpush.xpose.msra.mxu0 0.0
        %773 = vmatpush.xpose.msra.mxu0 0.0
        %774 = vmatpush.xpose.msra.mxu0 0.0
        %775 = vmatpush.xpose.msra.mxu0 0.0
        %776 = vmatpush.xpose.msra.mxu0 0.0
        %777 = vmatpush.xpose.msra.mxu0 0.0
        %778 = vmatpush.xpose.msra.mxu0 %v763
        %779 = vmatpush.xpose.msra.mxu0 %v760
        %780 = vmatpush.xpose.msra.mxu0 %v757
        %781 = vmatmul.f32.gmra.mxu0 %v754
        %v782 = vpop.f32.mrf.mxu0
        %v783 = vadd.f32 0.0, %v782
        %784 = vdwg.mxu0
        %v786 = vsel %vm752, %v748, 0
        %v789 = vsel %vm752, %v683, 0
        %v792 = vsel %vm752, %v684, 0
        %v795 = vsel %vm752, %v685, 0
        %797 = vmatpush.xpose.msra.mxu0 0.0
        %798 = vmatpush.xpose.msra.mxu0 0.0
        %799 = vmatpush.xpose.msra.mxu0 0.0
        %800 = vmatpush.xpose.msra.mxu0 0.0
        %801 = vmatpush.xpose.msra.mxu0 0.0
        %802 = vmatpush.xpose.msra.mxu0 0.0
        %803 = vmatpush.xpose.msra.mxu0 0.0
        %804 = vmatpush.xpose.msra.mxu0 0.0
        %805 = vmatpush.xpose.msra.mxu0 0.0
        %806 = vmatpush.xpose.msra.mxu0 0.0
        %807 = vmatpush.xpose.msra.mxu0 0.0
        %808 = vmatpush.xpose.msra.mxu0 0.0
        %809 = vmatpush.xpose.msra.mxu0 0.0
        %810 = vmatpush.xpose.msra.mxu0 %v795
        %811 = vmatpush.xpose.msra.mxu0 %v792
        %812 = vmatpush.xpose.msra.mxu0 %v789
        %813 = vmatmul.f32.gmra.mxu0 %v786
        %v814 = vpop.f32.mrf.mxu0
        %v815 = vadd.f32 %v783, %v814
        %816 = vdwg.mxu0
        %v817 = vmul.f32 %v815, %v697
        %v819 = vsel %vm701, %v675, 0
        %v822 = vsel %vm701, %v637, 0
        %v825 = vsel %vm701, %v638, 0
        %v828 = vsel %vm701, %v639, 0
        %830 = vmatpush.xpose.msra.mxu0 0.0
        %831 = vmatpush.xpose.msra.mxu0 0.0
        %832 = vmatpush.xpose.msra.mxu0 0.0
        %833 = vmatpush.xpose.msra.mxu0 0.0
        %834 = vmatpush.xpose.msra.mxu0 0.0
        %835 = vmatpush.xpose.msra.mxu0 0.0
        %836 = vmatpush.xpose.msra.mxu0 0.0
        %837 = vmatpush.xpose.msra.mxu0 0.0
        %838 = vmatpush.xpose.msra.mxu0 0.0
        %839 = vmatpush.xpose.msra.mxu0 0.0
        %840 = vmatpush.xpose.msra.mxu0 0.0
        %841 = vmatpush.xpose.msra.mxu0 0.0
        %842 = vmatpush.xpose.msra.mxu0 0.0
        %843 = vmatpush.xpose.msra.mxu0 %v828
        %844 = vmatpush.xpose.msra.mxu0 %v825
        %845 = vmatpush.xpose.msra.mxu0 %v822
        %846 = vmatmul.f32.gmra.mxu0 %v819
        %v847 = vpop.f32.mrf.mxu0
        %v848 = vadd.f32 %v817, %v847
        %849 = vdwg.mxu0
        %v850 = vadd.f32 %v848, %v699
        %vm851 = vcmask 195584
        %v852 = vsel %vm851, %v850, -inf
        %853 = vmax.xlane.f32.xlu0 %v852
        %v854 = vpop.xlane.xlu0 %853
        %v855 = vsub.f32 %v850, %v854
        %v856 = vmul.f32 %v855, 1.442695
        %v857 = vpow.pop %v856
        %v858 = vsel %vm851, %v857, 0.0
        %859 = vadd.xlane.f32.xlu0 %v858
        %v860 = vpop.xlane.xlu0 %859
        %v862 = vsel %vm851, %v857, 0
        %864 = vmatpush.msra.mxu0 0.0
        %865 = vmatpush.msra.mxu0 0.0
        %866 = vmatpush.msra.mxu0 0.0
        %867 = vmatpush.msra.mxu0 0.0
        %868 = vmatpush.msra.mxu0 0.0
        %869 = vmatpush.msra.mxu0 0.0
        %870 = vmatpush.msra.mxu0 0.0
        %871 = vmatpush.msra.mxu0 0.0
        %872 = vmatpush.msra.mxu0 0.0
        %873 = vmatpush.msra.mxu0 0.0
        %874 = vmatpush.msra.mxu0 0.0
        %875 = vmatpush.msra.mxu0 0.0
        %876 = vmatpush.msra.mxu0 0.0
        %877 = vmatpush.msra.mxu0 %v642
        %878 = vmatpush.msra.mxu0 %v641
        %879 = vmatpush.msra.mxu0 %v640
        %880 = vmatmul.f32.gmra.mxu0 %v862
        %v881 = vpop.f32.mrf.mxu0
        %v882 = vadd.f32 0.0, %v881
        %883 = vdwg.mxu0
        %v884 = vrcp.pop %v860
        %v885 = vmul.f32 %v860, %v884
        %v886 = vsub.f32 1.0, %v885
        %v887 = vmul.f32 %v884, %v886
        %v888 = vadd.f32 %v884, %v887
        %vm889 = vweird.f32 %v860
        %vm890 = vweird.f32 %v884
        %vm891 = vmor %vm889, %vm890
        %v892 = vsel %vm891, %v884, %v888
        %v893 = vand.u32 2147483647, %v860
        %vm894 = vcmp.eq.f32.partialorder %v893, 8.507059e+37
        %v895 = vand.u32 %v860, 2147483648
        %v896 = vor.u32 1.1754944e-38, %v895
        %v897 = vsel %vm894, %v896, %v892
        %v898 = vmul.f32 %v882, %v897
        %899 = vst.msk [vmem:[#allocation2] sm:$0xff] %vm701, %v898
        %v900 = vld [vmem:[%s8 + $0x8] sm:$0xff]
        %901 = vrot.lane.b32.xlu0 %v680, 120
        %v902 = vpop.permute.xlu0 %901
        %v903 = vsel %vm701, %v902, 0
        %905 = vmatpush.msra.mxu0 0.0
        %906 = vmatpush.msra.mxu0 0.0
        %907 = vmatpush.msra.mxu0 0.0
        %908 = vmatpush.msra.mxu0 0.0
        %909 = vmatpush.msra.mxu0 0.0
        %910 = vmatpush.msra.mxu0 0.0
        %911 = vmatpush.msra.mxu0 0.0
        %912 = vmatpush.msra.mxu0 0.0
        %913 = vmatpush.msra.mxu0 0.0
        %914 = vmatpush.msra.mxu0 0.0
        %915 = vmatpush.msra.mxu0 0.0
        %916 = vmatpush.msra.mxu0 0.0
        %917 = vmatpush.msra.mxu0 0.0
        %918 = vmatpush.msra.mxu0 0.0
        %919 = vmatpush.msra.mxu0 0.0
        %920 = vmatpush.msra.mxu0 %v900
        %921 = vmatmul.f32.gmra.mxu0 %v903
        %v922 = vpop.f32.mrf.mxu0
        %v923 = vadd.f32 0.0, %v922
        %924 = vdwg.mxu0
        %v925 = vld [vmem:[%s9 + $0x8] sm:$0xff]
        %926 = vmatpush.msra.mxu0 0.0
        %927 = vmatpush.msra.mxu0 0.0
        %928 = vmatpush.msra.mxu0 0.0
        %929 = vmatpush.msra.mxu0 0.0
        %930 = vmatpush.msra.mxu0 0.0
        %931 = vmatpush.msra.mxu0 0.0
        %932 = vmatpush.msra.mxu0 0.0
        %933 = vmatpush.msra.mxu0 0.0
        %934 = vmatpush.msra.mxu0 0.0
        %935 = vmatpush.msra.mxu0 0.0
        %936 = vmatpush.msra.mxu0 0.0
        %937 = vmatpush.msra.mxu0 0.0
        %938 = vmatpush.msra.mxu0 0.0
        %939 = vmatpush.msra.mxu0 0.0
        %940 = vmatpush.msra.mxu0 0.0
        %941 = vmatpush.msra.mxu0 %v925
        %942 = vmatmul.f32.gmra.mxu0 %v903
        %v943 = vpop.f32.mrf.mxu0
        %v944 = vadd.f32 0.0, %v943
        %945 = vdwg.mxu0
        %v946 = vmul.f32 %v923, %v681
        %v947 = vmul.f32 %v944, %v682
        %v948 = vadd.f32 %v946, %v947
        %v949 = vmul.f32 %v944, %v681
        %v950 = vmul.f32 %v923, %v682
        %v951 = vsub.f32 %v949, %v950
        %v953 = vsel %vm752, %v951, 0
        %955 = vmatpush.xpose.msra.mxu0 0.0
        %956 = vmatpush.xpose.msra.mxu0 0.0
        %957 = vmatpush.xpose.msra.mxu0 0.0
        %958 = vmatpush.xpose.msra.mxu0 0.0
        %959 = vmatpush.xpose.msra.mxu0 0.0
        %960 = vmatpush.xpose.msra.mxu0 0.0
        %961 = vmatpush.xpose.msra.mxu0 0.0
        %962 = vmatpush.xpose.msra.mxu0 0.0
        %963 = vmatpush.xpose.msra.mxu0 0.0
        %964 = vmatpush.xpose.msra.mxu0 0.0
        %965 = vmatpush.xpose.msra.mxu0 0.0
        %966 = vmatpush.xpose.msra.mxu0 0.0
        %967 = vmatpush.xpose.msra.mxu0 0.0
        %968 = vmatpush.xpose.msra.mxu0 %v763
        %969 = vmatpush.xpose.msra.mxu0 %v760
        %970 = vmatpush.xpose.msra.mxu0 %v757
        %971 = vmatmul.f32.gmra.mxu0 %v953
        %v972 = vpop.f32.mrf.mxu0
        %v973 = vadd.f32 0.0, %v972
        %974 = vdwg.mxu0
        %v976 = vsel %vm752, %v948, 0
        %978 = vmatpush.xpose.msra.mxu0 0.0
        %979 = vmatpush.xpose.msra.mxu0 0.0
        %980 = vmatpush.xpose.msra.mxu0 0.0
        %981 = vmatpush.xpose.msra.mxu0 0.0
        %982 = vmatpush.xpose.msra.mxu0 0.0
        %983 = vmatpush.xpose.msra.mxu0 0.0
        %984 = vmatpush.xpose.msra.mxu0 0.0
        %985 = vmatpush.xpose.msra.mxu0 0.0
        %986 = vmatpush.xpose.msra.mxu0 0.0
        %987 = vmatpush.xpose.msra.mxu0 0.0
        %988 = vmatpush.xpose.msra.mxu0 0.0
        %989 = vmatpush.xpose.msra.mxu0 0.0
        %990 = vmatpush.xpose.msra.mxu0 0.0
        %991 = vmatpush.xpose.msra.mxu0 %v795
        %992 = vmatpush.xpose.msra.mxu0 %v792
        %993 = vmatpush.xpose.msra.mxu0 %v789
        %994 = vmatmul.f32.gmra.mxu0 %v976
        %v995 = vpop.f32.mrf.mxu0
        %v996 = vadd.f32 %v973, %v995
        %997 = vdwg.mxu0
        %v998 = vmul.f32 %v996, %v697
        %999 = vrot.lane.b32.xlu0 %v675, 120
        %v1000 = vpop.permute.xlu0 %999
        %1001 = vrot.lane.b32.xlu0 %v637, 120
        %v1002 = vpop.permute.xlu0 %1001
        %1003 = vrot.lane.b32.xlu0 %v638, 120
        %v1004 = vpop.permute.xlu0 %1003
        %1005 = vrot.lane.b32.xlu0 %v639, 120
        %v1006 = vpop.permute.xlu0 %1005
        %v1007 = vsel %vm701, %v1000, 0
        %v1009 = vsel %vm701, %v1002, 0
        %v1011 = vsel %vm701, %v1004, 0
        %v1013 = vsel %vm701, %v1006, 0
        %1015 = vmatpush.xpose.msra.mxu0 0.0
        %1016 = vmatpush.xpose.msra.mxu0 0.0
        %1017 = vmatpush.xpose.msra.mxu0 0.0
        %1018 = vmatpush.xpose.msra.mxu0 0.0
        %1019 = vmatpush.xpose.msra.mxu0 0.0
        %1020 = vmatpush.xpose.msra.mxu0 0.0
        %1021 = vmatpush.xpose.msra.mxu0 0.0
        %1022 = vmatpush.xpose.msra.mxu0 0.0
        %1023 = vmatpush.xpose.msra.mxu0 0.0
        %1024 = vmatpush.xpose.msra.mxu0 0.0
        %1025 = vmatpush.xpose.msra.mxu0 0.0
        %1026 = vmatpush.xpose.msra.mxu0 0.0
        %1027 = vmatpush.xpose.msra.mxu0 0.0
        %1028 = vmatpush.xpose.msra.mxu0 %v1013
        %1029 = vmatpush.xpose.msra.mxu0 %v1011
        %1030 = vmatpush.xpose.msra.mxu0 %v1009
        %1031 = vmatmul.f32.gmra.mxu0 %v1007
        %v1032 = vpop.f32.mrf.mxu0
        %v1033 = vadd.f32 %v998, %v1032
        %1034 = vdwg.mxu0
        %v1035 = vadd.f32 %v1033, %v699
        %v1036 = vsel %vm851, %v1035, -inf
        %1037 = vmax.xlane.f32.xlu0 %v1036
        %v1038 = vpop.xlane.xlu0 %1037
        %v1039 = vsub.f32 %v1035, %v1038
        %v1040 = vmul.f32 %v1039, 1.442695
        %v1041 = vpow.pop %v1040
        %v1042 = vsel %vm851, %v1041, 0.0
        %1043 = vadd.xlane.f32.xlu0 %v1042
        %v1044 = vpop.xlane.xlu0 %1043
        %1048 = vrot.lane.b32.xlu0 %v640, 120
        %v1049 = vpop.permute.xlu0 %1048
        %1050 = vrot.lane.b32.xlu0 %v641, 120
        %v1051 = vpop.permute.xlu0 %1050
        %1052 = vrot.lane.b32.xlu0 %v642, 120
        %v1053 = vpop.permute.xlu0 %1052
        %v1058 = vsel %vm851, %v1041, 0
        %1060 = vmatpush.msra.mxu0 0.0
        %1061 = vmatpush.msra.mxu0 0.0
        %1062 = vmatpush.msra.mxu0 0.0
        %1063 = vmatpush.msra.mxu0 0.0
        %1064 = vmatpush.msra.mxu0 0.0
        %1065 = vmatpush.msra.mxu0 0.0
        %1066 = vmatpush.msra.mxu0 0.0
        %1067 = vmatpush.msra.mxu0 0.0
        %1068 = vmatpush.msra.mxu0 0.0
        %1069 = vmatpush.msra.mxu0 0.0
        %1070 = vmatpush.msra.mxu0 0.0
        %1071 = vmatpush.msra.mxu0 0.0
        %1072 = vmatpush.msra.mxu0 0.0
        %1073 = vmatpush.msra.mxu0 %v1053
        %1074 = vmatpush.msra.mxu0 %v1051
        %1075 = vmatpush.msra.mxu0 %v1049
        %1076 = vmatmul.f32.gmra.mxu0 %v1058
        %v1077 = vpop.f32.mrf.mxu0
        %v1078 = vadd.f32 0.0, %v1077
        %1079 = vdwg.mxu0
        %v1080 = vrcp.pop %v1044
        %v1081 = vmul.f32 %v1044, %v1080
        %v1082 = vsub.f32 1.0, %v1081
        %v1083 = vmul.f32 %v1080, %v1082
        %v1084 = vadd.f32 %v1080, %v1083
        %vm1085 = vweird.f32 %v1044
        %vm1086 = vweird.f32 %v1080
        %vm1087 = vmor %vm1085, %vm1086
        %v1088 = vsel %vm1087, %v1080, %v1084
        %v1089 = vand.u32 2147483647, %v1044
        %vm1090 = vcmp.eq.f32.partialorder %v1089, 8.507059e+37
        %v1091 = vand.u32 %v1044, 2147483648
        %v1092 = vor.u32 1.1754944e-38, %v1091
        %v1093 = vsel %vm1090, %v1092, %v1088
        %v1094 = vmul.f32 %v1078, %v1093
        %1096 = vrot.lane.b32.xlu0 %v1094, 8
        %v1097 = vpop.permute.xlu0 %1096
        %vm1099 = vcmask 130112
        %1100 = vst.msk [vmem:[#allocation2] sm:$0xff] %vm1099, %v1097
        %v1101 = vld [vmem:[%s8 + $0x10] sm:$0xff]
        %1102 = vrot.lane.b32.xlu0 %v680, 112
        %v1103 = vpop.permute.xlu0 %1102
        %v1104 = vsel %vm701, %v1103, 0
        %1106 = vmatpush.msra.mxu0 0.0
        %1107 = vmatpush.msra.mxu0 0.0
        %1108 = vmatpush.msra.mxu0 0.0
        %1109 = vmatpush.msra.mxu0 0.0
        %1110 = vmatpush.msra.mxu0 0.0
        %1111 = vmatpush.msra.mxu0 0.0
        %1112 = vmatpush.msra.mxu0 0.0
        %1113 = vmatpush.msra.mxu0 0.0
        %1114 = vmatpush.msra.mxu0 0.0
        %1115 = vmatpush.msra.mxu0 0.0
        %1116 = vmatpush.msra.mxu0 0.0
        %1117 = vmatpush.msra.mxu0 0.0
        %1118 = vmatpush.msra.mxu0 0.0
        %1119 = vmatpush.msra.mxu0 0.0
        %1120 = vmatpush.msra.mxu0 0.0
        %1121 = vmatpush.msra.mxu0 %v1101
        %1122 = vmatmul.f32.gmra.mxu0 %v1104
        %v1123 = vpop.f32.mrf.mxu0
        %v1124 = vadd.f32 0.0, %v1123
        %1125 = vdwg.mxu0
        %v1126 = vld [vmem:[%s9 + $0x10] sm:$0xff]
        %1127 = vmatpush.msra.mxu0 0.0
        %1128 = vmatpush.msra.mxu0 0.0
        %1129 = vmatpush.msra.mxu0 0.0
        %1130 = vmatpush.msra.mxu0 0.0
        %1131 = vmatpush.msra.mxu0 0.0
        %1132 = vmatpush.msra.mxu0 0.0
        %1133 = vmatpush.msra.mxu0 0.0
        %1134 = vmatpush.msra.mxu0 0.0
        %1135 = vmatpush.msra.mxu0 0.0
        %1136 = vmatpush.msra.mxu0 0.0
        %1137 = vmatpush.msra.mxu0 0.0
        %1138 = vmatpush.msra.mxu0 0.0
        %1139 = vmatpush.msra.mxu0 0.0
        %1140 = vmatpush.msra.mxu0 0.0
        %1141 = vmatpush.msra.mxu0 0.0
        %1142 = vmatpush.msra.mxu0 %v1126
        %1143 = vmatmul.f32.gmra.mxu0 %v1104
        %v1144 = vpop.f32.mrf.mxu0
        %v1145 = vadd.f32 0.0, %v1144
        %1146 = vdwg.mxu0
        %v1147 = vmul.f32 %v1124, %v681
        %v1148 = vmul.f32 %v1145, %v682
        %v1149 = vadd.f32 %v1147, %v1148
        %v1150 = vmul.f32 %v1145, %v681
        %v1151 = vmul.f32 %v1124, %v682
        %v1152 = vsub.f32 %v1150, %v1151
        %v1154 = vsel %vm752, %v1152, 0
        %1156 = vmatpush.xpose.msra.mxu0 0.0
        %1157 = vmatpush.xpose.msra.mxu0 0.0
        %1158 = vmatpush.xpose.msra.mxu0 0.0
        %1159 = vmatpush.xpose.msra.mxu0 0.0
        %1160 = vmatpush.xpose.msra.mxu0 0.0
        %1161 = vmatpush.xpose.msra.mxu0 0.0
        %1162 = vmatpush.xpose.msra.mxu0 0.0
        %1163 = vmatpush.xpose.msra.mxu0 0.0
        %1164 = vmatpush.xpose.msra.mxu0 0.0
        %1165 = vmatpush.xpose.msra.mxu0 0.0
        %1166 = vmatpush.xpose.msra.mxu0 0.0
        %1167 = vmatpush.xpose.msra.mxu0 0.0
        %1168 = vmatpush.xpose.msra.mxu0 0.0
        %1169 = vmatpush.xpose.msra.mxu0 %v763
        %1170 = vmatpush.xpose.msra.mxu0 %v760
        %1171 = vmatpush.xpose.msra.mxu0 %v757
        %1172 = vmatmul.f32.gmra.mxu0 %v1154
        %v1173 = vpop.f32.mrf.mxu0
        %v1174 = vadd.f32 0.0, %v1173
        %1175 = vdwg.mxu0
        %v1177 = vsel %vm752, %v1149, 0
        %1179 = vmatpush.xpose.msra.mxu0 0.0
        %1180 = vmatpush.xpose.msra.mxu0 0.0
        %1181 = vmatpush.xpose.msra.mxu0 0.0
        %1182 = vmatpush.xpose.msra.mxu0 0.0
        %1183 = vmatpush.xpose.msra.mxu0 0.0
        %1184 = vmatpush.xpose.msra.mxu0 0.0
        %1185 = vmatpush.xpose.msra.mxu0 0.0
        %1186 = vmatpush.xpose.msra.mxu0 0.0
        %1187 = vmatpush.xpose.msra.mxu0 0.0
        %1188 = vmatpush.xpose.msra.mxu0 0.0
        %1189 = vmatpush.xpose.msra.mxu0 0.0
        %1190 = vmatpush.xpose.msra.mxu0 0.0
        %1191 = vmatpush.xpose.msra.mxu0 0.0
        %1192 = vmatpush.xpose.msra.mxu0 %v795
        %1193 = vmatpush.xpose.msra.mxu0 %v792
        %1194 = vmatpush.xpose.msra.mxu0 %v789
        %1195 = vmatmul.f32.gmra.mxu0 %v1177
        %v1196 = vpop.f32.mrf.mxu0
        %v1197 = vadd.f32 %v1174, %v1196
        %1198 = vdwg.mxu0
        %v1199 = vmul.f32 %v1197, %v697
        %1200 = vrot.lane.b32.xlu0 %v675, 112
        %v1201 = vpop.permute.xlu0 %1200
        %1202 = vrot.lane.b32.xlu0 %v637, 112
        %v1203 = vpop.permute.xlu0 %1202
        %1204 = vrot.lane.b32.xlu0 %v638, 112
        %v1205 = vpop.permute.xlu0 %1204
        %1206 = vrot.lane.b32.xlu0 %v639, 112
        %v1207 = vpop.permute.xlu0 %1206
        %v1208 = vsel %vm701, %v1201, 0
        %v1210 = vsel %vm701, %v1203, 0
        %v1212 = vsel %vm701, %v1205, 0
        %v1214 = vsel %vm701, %v1207, 0
        %1216 = vmatpush.xpose.msra.mxu0 0.0
        %1217 = vmatpush.xpose.msra.mxu0 0.0
        %1218 = vmatpush.xpose.msra.mxu0 0.0
        %1219 = vmatpush.xpose.msra.mxu0 0.0
        %1220 = vmatpush.xpose.msra.mxu0 0.0
        %1221 = vmatpush.xpose.msra.mxu0 0.0
        %1222 = vmatpush.xpose.msra.mxu0 0.0
        %1223 = vmatpush.xpose.msra.mxu0 0.0
        %1224 = vmatpush.xpose.msra.mxu0 0.0
        %1225 = vmatpush.xpose.msra.mxu0 0.0
        %1226 = vmatpush.xpose.msra.mxu0 0.0
        %1227 = vmatpush.xpose.msra.mxu0 0.0
        %1228 = vmatpush.xpose.msra.mxu0 0.0
        %1229 = vmatpush.xpose.msra.mxu0 %v1214
        %1230 = vmatpush.xpose.msra.mxu0 %v1212
        %1231 = vmatpush.xpose.msra.mxu0 %v1210
        %1232 = vmatmul.f32.gmra.mxu0 %v1208
        %v1233 = vpop.f32.mrf.mxu0
        %v1234 = vadd.f32 %v1199, %v1233
        %1235 = vdwg.mxu0
        %v1236 = vadd.f32 %v1234, %v699
        %v1237 = vsel %vm851, %v1236, -inf
        %1238 = vmax.xlane.f32.xlu0 %v1237
        %v1239 = vpop.xlane.xlu0 %1238
        %v1240 = vsub.f32 %v1236, %v1239
        %v1241 = vmul.f32 %v1240, 1.442695
        %v1242 = vpow.pop %v1241
        %v1243 = vsel %vm851, %v1242, 0.0
        %1244 = vadd.xlane.f32.xlu0 %v1243
        %v1245 = vpop.xlane.xlu0 %1244
        %1246 = vrot.lane.b32.xlu0 %v640, 112
        %v1247 = vpop.permute.xlu0 %1246
        %1248 = vrot.lane.b32.xlu0 %v641, 112
        %v1249 = vpop.permute.xlu0 %1248
        %1250 = vrot.lane.b32.xlu0 %v642, 112
        %v1251 = vpop.permute.xlu0 %1250
        %v1256 = vsel %vm851, %v1242, 0
        %1258 = vmatpush.msra.mxu0 0.0
        %1259 = vmatpush.msra.mxu0 0.0
        %1260 = vmatpush.msra.mxu0 0.0
        %1261 = vmatpush.msra.mxu0 0.0
        %1262 = vmatpush.msra.mxu0 0.0
        %1263 = vmatpush.msra.mxu0 0.0
        %1264 = vmatpush.msra.mxu0 0.0
        %1265 = vmatpush.msra.mxu0 0.0
        %1266 = vmatpush.msra.mxu0 0.0
        %1267 = vmatpush.msra.mxu0 0.0
        %1268 = vmatpush.msra.mxu0 0.0
        %1269 = vmatpush.msra.mxu0 0.0
        %1270 = vmatpush.msra.mxu0 0.0
        %1271 = vmatpush.msra.mxu0 %v1251
        %1272 = vmatpush.msra.mxu0 %v1249
        %1273 = vmatpush.msra.mxu0 %v1247
        %1274 = vmatmul.f32.gmra.mxu0 %v1256
        %v1275 = vpop.f32.mrf.mxu0
        %v1276 = vadd.f32 0.0, %v1275
        %1277 = vdwg.mxu0
        %v1278 = vrcp.pop %v1245
        %v1279 = vmul.f32 %v1245, %v1278
        %v1280 = vsub.f32 1.0, %v1279
        %v1281 = vmul.f32 %v1278, %v1280
        %v1282 = vadd.f32 %v1278, %v1281
        %vm1283 = vweird.f32 %v1245
        %vm1284 = vweird.f32 %v1278
        %vm1285 = vmor %vm1283, %vm1284
        %v1286 = vsel %vm1285, %v1278, %v1282
        %v1287 = vand.u32 2147483647, %v1245
        %vm1288 = vcmp.eq.f32.partialorder %v1287, 8.507059e+37
        %v1289 = vand.u32 %v1245, 2147483648
        %v1290 = vor.u32 1.1754944e-38, %v1289
        %v1291 = vsel %vm1288, %v1290, %v1286
        %v1292 = vmul.f32 %v1276, %v1291
        %1294 = vrot.lane.b32.xlu0 %v1292, 16
        %v1295 = vpop.permute.xlu0 %1294
        %vm1297 = vcmask 195712
        %1298 = vst.msk [vmem:[#allocation2] sm:$0xff] %vm1297, %v1295
        %v1299 = vld [vmem:[%s8 + $0x18] sm:$0xff]
        %1300 = vrot.lane.b32.xlu0 %v680, 104
        %v1301 = vpop.permute.xlu0 %1300
        %v1302 = vsel %vm701, %v1301, 0
        %1304 = vmatpush.msra.mxu0 0.0
        %1305 = vmatpush.msra.mxu0 0.0
        %1306 = vmatpush.msra.mxu0 0.0
        %1307 = vmatpush.msra.mxu0 0.0
        %1308 = vmatpush.msra.mxu0 0.0
        %1309 = vmatpush.msra.mxu0 0.0
        %1310 = vmatpush.msra.mxu0 0.0
        %1311 = vmatpush.msra.mxu0 0.0
        %1312 = vmatpush.msra.mxu0 0.0
        %1313 = vmatpush.msra.mxu0 0.0
        %1314 = vmatpush.msra.mxu0 0.0
        %1315 = vmatpush.msra.mxu0 0.0
        %1316 = vmatpush.msra.mxu0 0.0
        %1317 = vmatpush.msra.mxu0 0.0
        %1318 = vmatpush.msra.mxu0 0.0
        %1319 = vmatpush.msra.mxu0 %v1299
        %1320 = vmatmul.f32.gmra.mxu0 %v1302
        %v1321 = vpop.f32.mrf.mxu0
        %v1322 = vadd.f32 0.0, %v1321
        %1323 = vdwg.mxu0
        %v1324 = vld [vmem:[%s9 + $0x18] sm:$0xff]
        %1325 = vmatpush.msra.mxu0 0.0
        %1326 = vmatpush.msra.mxu0 0.0
        %1327 = vmatpush.msra.mxu0 0.0
        %1328 = vmatpush.msra.mxu0 0.0
        %1329 = vmatpush.msra.mxu0 0.0
        %1330 = vmatpush.msra.mxu0 0.0
        %1331 = vmatpush.msra.mxu0 0.0
        %1332 = vmatpush.msra.mxu0 0.0
        %1333 = vmatpush.msra.mxu0 0.0
        %1334 = vmatpush.msra.mxu0 0.0
        %1335 = vmatpush.msra.mxu0 0.0
        %1336 = vmatpush.msra.mxu0 0.0
        %1337 = vmatpush.msra.mxu0 0.0
        %1338 = vmatpush.msra.mxu0 0.0
        %1339 = vmatpush.msra.mxu0 0.0
        %1340 = vmatpush.msra.mxu0 %v1324
        %1341 = vmatmul.f32.gmra.mxu0 %v1302
        %v1342 = vpop.f32.mrf.mxu0
        %v1343 = vadd.f32 0.0, %v1342
        %1344 = vdwg.mxu0
        %v1345 = vmul.f32 %v1322, %v681
        %v1346 = vmul.f32 %v1343, %v682
        %v1347 = vadd.f32 %v1345, %v1346
        %v1348 = vmul.f32 %v1343, %v681
        %v1349 = vmul.f32 %v1322, %v682
        %v1350 = vsub.f32 %v1348, %v1349
        %v1352 = vsel %vm752, %v1350, 0
        %1354 = vmatpush.xpose.msra.mxu0 0.0
        %1355 = vmatpush.xpose.msra.mxu0 0.0
        %1356 = vmatpush.xpose.msra.mxu0 0.0
        %1357 = vmatpush.xpose.msra.mxu0 0.0
        %1358 = vmatpush.xpose.msra.mxu0 0.0
        %1359 = vmatpush.xpose.msra.mxu0 0.0
        %1360 = vmatpush.xpose.msra.mxu0 0.0
        %1361 = vmatpush.xpose.msra.mxu0 0.0
        %1362 = vmatpush.xpose.msra.mxu0 0.0
        %1363 = vmatpush.xpose.msra.mxu0 0.0
        %1364 = vmatpush.xpose.msra.mxu0 0.0
        %1365 = vmatpush.xpose.msra.mxu0 0.0
        %1366 = vmatpush.xpose.msra.mxu0 0.0
        %1367 = vmatpush.xpose.msra.mxu0 %v763
        %1368 = vmatpush.xpose.msra.mxu0 %v760
        %1369 = vmatpush.xpose.msra.mxu0 %v757
        %1370 = vmatmul.f32.gmra.mxu0 %v1352
        %v1371 = vpop.f32.mrf.mxu0
        %v1372 = vadd.f32 0.0, %v1371
        %1373 = vdwg.mxu0
        %v1375 = vsel %vm752, %v1347, 0
        %1377 = vmatpush.xpose.msra.mxu0 0.0
        %1378 = vmatpush.xpose.msra.mxu0 0.0
        %1379 = vmatpush.xpose.msra.mxu0 0.0
        %1380 = vmatpush.xpose.msra.mxu0 0.0
        %1381 = vmatpush.xpose.msra.mxu0 0.0
        %1382 = vmatpush.xpose.msra.mxu0 0.0
        %1383 = vmatpush.xpose.msra.mxu0 0.0
        %1384 = vmatpush.xpose.msra.mxu0 0.0
        %1385 = vmatpush.xpose.msra.mxu0 0.0
        %1386 = vmatpush.xpose.msra.mxu0 0.0
        %1387 = vmatpush.xpose.msra.mxu0 0.0
        %1388 = vmatpush.xpose.msra.mxu0 0.0
        %1389 = vmatpush.xpose.msra.mxu0 0.0
        %1390 = vmatpush.xpose.msra.mxu0 %v795
        %1391 = vmatpush.xpose.msra.mxu0 %v792
        %1392 = vmatpush.xpose.msra.mxu0 %v789
        %1393 = vmatmul.f32.gmra.mxu0 %v1375
        %v1394 = vpop.f32.mrf.mxu0
        %v1395 = vadd.f32 %v1372, %v1394
        %1396 = vdwg.mxu0
        %v1397 = vmul.f32 %v1395, %v697
        %1398 = vrot.lane.b32.xlu0 %v675, 104
        %v1399 = vpop.permute.xlu0 %1398
        %1400 = vrot.lane.b32.xlu0 %v637, 104
        %v1401 = vpop.permute.xlu0 %1400
        %1402 = vrot.lane.b32.xlu0 %v638, 104
        %v1403 = vpop.permute.xlu0 %1402
        %1404 = vrot.lane.b32.xlu0 %v639, 104
        %v1405 = vpop.permute.xlu0 %1404
        %v1406 = vsel %vm701, %v1399, 0
        %v1408 = vsel %vm701, %v1401, 0
        %v1410 = vsel %vm701, %v1403, 0
        %v1412 = vsel %vm701, %v1405, 0
        %1414 = vmatpush.xpose.msra.mxu0 0.0
        %1415 = vmatpush.xpose.msra.mxu0 0.0
        %1416 = vmatpush.xpose.msra.mxu0 0.0
        %1417 = vmatpush.xpose.msra.mxu0 0.0
        %1418 = vmatpush.xpose.msra.mxu0 0.0
        %1419 = vmatpush.xpose.msra.mxu0 0.0
        %1420 = vmatpush.xpose.msra.mxu0 0.0
        %1421 = vmatpush.xpose.msra.mxu0 0.0
        %1422 = vmatpush.xpose.msra.mxu0 0.0
        %1423 = vmatpush.xpose.msra.mxu0 0.0
        %1424 = vmatpush.xpose.msra.mxu0 0.0
        %1425 = vmatpush.xpose.msra.mxu0 0.0
        %1426 = vmatpush.xpose.msra.mxu0 0.0
        %1427 = vmatpush.xpose.msra.mxu0 %v1412
        %1428 = vmatpush.xpose.msra.mxu0 %v1410
        %1429 = vmatpush.xpose.msra.mxu0 %v1408
        %1430 = vmatmul.f32.gmra.mxu0 %v1406
        %v1431 = vpop.f32.mrf.mxu0
        %v1432 = vadd.f32 %v1397, %v1431
        %1433 = vdwg.mxu0
        %v1434 = vadd.f32 %v1432, %v699
        %v1435 = vsel %vm851, %v1434, -inf
        %1436 = vmax.xlane.f32.xlu0 %v1435
        %v1437 = vpop.xlane.xlu0 %1436
        %v1438 = vsub.f32 %v1434, %v1437
        %v1439 = vmul.f32 %v1438, 1.442695
        %v1440 = vpow.pop %v1439
        %v1441 = vsel %vm851, %v1440, 0.0
        %1442 = vadd.xlane.f32.xlu0 %v1441
        %v1443 = vpop.xlane.xlu0 %1442
        %1444 = vrot.lane.b32.xlu0 %v640, 104
        %v1445 = vpop.permute.xlu0 %1444
        %1446 = vrot.lane.b32.xlu0 %v641, 104
        %v1447 = vpop.permute.xlu0 %1446
        %1448 = vrot.lane.b32.xlu0 %v642, 104
        %v1449 = vpop.permute.xlu0 %1448
        %v1454 = vsel %vm851, %v1440, 0
        %1456 = vmatpush.msra.mxu0 0.0
        %1457 = vmatpush.msra.mxu0 0.0
        %1458 = vmatpush.msra.mxu0 0.0
        %1459 = vmatpush.msra.mxu0 0.0
        %1460 = vmatpush.msra.mxu0 0.0
        %1461 = vmatpush.msra.mxu0 0.0
        %1462 = vmatpush.msra.mxu0 0.0
        %1463 = vmatpush.msra.mxu0 0.0
        %1464 = vmatpush.msra.mxu0 0.0
        %1465 = vmatpush.msra.mxu0 0.0
        %1466 = vmatpush.msra.mxu0 0.0
        %1467 = vmatpush.msra.mxu0 0.0
        %1468 = vmatpush.msra.mxu0 0.0
        %1469 = vmatpush.msra.mxu0 %v1449
        %1470 = vmatpush.msra.mxu0 %v1447
        %1471 = vmatpush.msra.mxu0 %v1445
        %1472 = vmatmul.f32.gmra.mxu0 %v1454
        %v1473 = vpop.f32.mrf.mxu0
        %v1474 = vadd.f32 0.0, %v1473
        %1475 = vdwg.mxu0
        %v1476 = vrcp.pop %v1443
        %v1477 = vmul.f32 %v1443, %v1476
        %v1478 = vsub.f32 1.0, %v1477
        %v1479 = vmul.f32 %v1476, %v1478
        %v1480 = vadd.f32 %v1476, %v1479
        %vm1481 = vweird.f32 %v1443
        %vm1482 = vweird.f32 %v1476
        %vm1483 = vmor %vm1481, %vm1482
        %v1484 = vsel %vm1483, %v1476, %v1480
        %v1485 = vand.u32 2147483647, %v1443
        %vm1486 = vcmp.eq.f32.partialorder %v1485, 8.507059e+37
        %v1487 = vand.u32 %v1443, 2147483648
        %v1488 = vor.u32 1.1754944e-38, %v1487
        %v1489 = vsel %vm1486, %v1488, %v1484
        %v1490 = vmul.f32 %v1474, %v1489
        %1492 = vrot.lane.b32.xlu0 %v1490, 24
        %v1493 = vpop.permute.xlu0 %1492
        %vm1495 = vcmask 261312
        %1496 = vst.msk [vmem:[#allocation2] sm:$0xff] %vm1495, %v1493
        %v1497 = vld [vmem:[#allocation2] sm:$0xff]
        %v1498 = vld [vmem:[%s12] sm:$0xff]
        %v1499 = vld [vmem:[%s12 + $0x8] sm:$0xff]
        %v1500 = vld [vmem:[%s12 + $0x10] sm:$0xff]
        %v1501 = vld [vmem:[%s12 + $0x18] sm:$0xff]
        %v1502 = vld [vmem:[%s13] sm:$0x1]
        %v1504 = vperm.slane %v1502, 0
        %v1507 = vsel %vm647, %v1497, 0
        %1509 = vmatpush.msra.mxu0 0.0
        %1510 = vmatpush.msra.mxu0 0.0
        %1511 = vmatpush.msra.mxu0 0.0
        %1512 = vmatpush.msra.mxu0 0.0
        %1513 = vmatpush.msra.mxu0 0.0
        %1514 = vmatpush.msra.mxu0 0.0
        %1515 = vmatpush.msra.mxu0 0.0
        %1516 = vmatpush.msra.mxu0 0.0
        %1517 = vmatpush.msra.mxu0 0.0
        %1518 = vmatpush.msra.mxu0 0.0
        %1519 = vmatpush.msra.mxu0 0.0
        %1520 = vmatpush.msra.mxu0 0.0
        %1521 = vmatpush.msra.mxu0 %v1501
        %1522 = vmatpush.msra.mxu0 %v1500
        %1523 = vmatpush.msra.mxu0 %v1499
        %1524 = vmatpush.msra.mxu0 %v1498
        %1525 = vmatmul.f32.gmra.mxu0 %v1507
        %v1526 = vpop.f32.mrf.mxu0
        %v1527 = vadd.f32 %v1504, %v1526
        %1528 = vdwg.mxu0
        %v1529 = vadd.f32 %v636, %v1527
        %v1530 = vld [vmem:[%s14] sm:$0x1]
        %v1531 = vld [vmem:[%s15] sm:$0x1]
        %v1532 = vsel %vm647, %v1529, 0.0
        %1533 = vadd.xlane.f32.xlu0 %v1532
        %v1534 = vpop.xlane.xlu0 %1533
        %v1535 = vrcp.pop 32.0
        %v1536 = vmul.f32 32.0, %v1535
        %v1537 = vsub.f32 1.0, %v1536
        %v1538 = vmul.f32 %v1535, %v1537
        %v1539 = vadd.f32 %v1535, %v1538
        %vm1540 = vweird.f32 %v1535
        %v1541 = vsel %vm1540, %v1535, %v1539
        %v1542 = vmul.f32 %v1534, %v1541
        %v1543 = vsub.f32 %v1529, %v1542
        %v1544 = vmul.f32 %v1543, %v1543
        %v1545 = vsel %vm647, %v1544, 0.0
        %1546 = vadd.xlane.f32.xlu0 %v1545
        %v1547 = vpop.xlane.xlu0 %1546
        %v1548 = vmul.f32 %v1547, %v1541
        %v1549 = vadd.f32 %v1548, 1e-05
        %v1550 = vrsqrt.pop %v1549
        %v1551 = vmul.f32 %v1550, %v1549
        %v1552 = vmul.f32 %v1551, %v1550
        %v1553 = vmul.f32 0.5, %v1552
        %v1554 = vsub.f32 1.5, %v1553
        %v1555 = vmul.f32 %v1550, %v1554
        %vm1556 = vweird.f32 %v1549
        %vm1557 = vweird.f32 %v1550
        %vm1558 = vmor %vm1556, %vm1557
        %v1559 = vsel %vm1558, %v1550, %v1555
        %v1560 = vmul.f32 %v1543, %v1559
        %v1562 = vperm.slane %v1530, 0
        %v1564 = vmul.f32 %v1560, %v1562
        %v1566 = vperm.slane %v1531, 0
        %v1568 = vadd.f32 %v1564, %v1566
        %1569 = vst.msk [vmem:[%s609] sm:$0xff] %vm647, %v1568
        %s1570 = sand.u32 %s416, 1
        %s1571 = scalar_lea.sflag [#allocation5], %s1570
        %s1572 = sand.u32 %s416, 1
        %s1573 = smul.addr %s1572, 8
        %s1574 = scalar_lea.vmem [#allocation6], %s1573
        // Predicated region
        $region89: #{tpu_custom_call.1} parent=83 // pred_check
          %p1575 = pneg %p426
        $region90: #{tpu_custom_call.1} parent=83 // pred_check_branch
          %1577 = sbr.rel (%p1575) target = $region92
        $region91: #{tpu_custom_call.1} parent=83 // pred_region
          %1579 = vsyncadd %s1571, 0
          %s1580 = smul.addr %s35, 3
          %s1581 = sadd.s32 %s36, %s1580
          %s1582 = smul.addr %s1581, 8
          %s1583 = scalar_lea.hbm %s16, %s1582
          %s1585 = sshll.u32 %s1574, 4
          %s1586 = int_to_ptr.vmem [resolvable:$true] %s1585
          %s1587 = sshll.u32 %s1583, 4
          %s1588 = int_to_ptr.hbm [resolvable:$true] %s1587
          %1590 = dma.vmem_to_hbm [thread:$0]  %s1586, 128, %s1588, %s1571
        $region92: #{tpu_custom_call.1} parent=83 // pred_fallthru
          _
      $region84: #{tpu_custom_call.1} parent=5 // pred_fallthru
        _
      %p1591 = scmp.le.s32.totalorder 2, %s26
      // Predicated region
      $region93: #{tpu_custom_call.1} parent=5 // pred_check
        %p1592 = pneg %p1591
      $region94: #{tpu_custom_call.1} parent=5 // pred_check_branch
        %1594 = sbr.rel (%p1592) target = $region96
      $region95: #{tpu_custom_call.1} parent=5 // pred_region
        %s1595 = ssub.s32 %s26, 2
        // Predicated region
        $region97: #{tpu_custom_call.1} parent=95 // pred_check
          %p1596 = pneg %p432
        $region98: #{tpu_custom_call.1} parent=95 // pred_check_branch
          %1598 = sbr.rel (%p1596) target = $region100
        $region99: #{tpu_custom_call.1} parent=95 // pred_region
          %s1599 = sand.u32 %s417, 1
          %s1600 = scalar_lea.sflag [#allocation5], %s1599
          %s1601 = sand.u32 %s417, 1
          %s1602 = smul.addr %s1601, 8
          %s1603 = scalar_lea.vmem [#allocation6], %s1602
          %1605 = dma.done %s1600, 128
        $region100: #{tpu_custom_call.1} parent=95 // pred_fallthru
          _
      $region96: #{tpu_custom_call.1} parent=5 // pred_fallthru
        _
    $region6: #{tpu_custom_call.1} parent=1 // loop_footer
      %s30 = sadd.s32 1, %s26
    $region7: #{tpu_custom_call.1} parent=1 // loop_footer_branch
      %25 = sbr.rel target = $region3
    $region8: #{tpu_custom_call.1} parent=1 // loop_exit
      _
    %1606 = vsyncpa [#allocation4], 1
    %s1607 = scalar_lea.sflag [#allocation4], 1
    %1608 = vsyncpa %s1607, 1
    %1609 = vsyncpa [#allocation5], 1
    %s1610 = scalar_lea.sflag [#allocation5], 1
    %1611 = vsyncpa %s1610, 1

</llo_original>
